<compile_context>
chip_gen: v7x
topology: tpu7x:2x2x1
jax: 0.10.0
libtpu: 0.0.40
codegen_flags: <defaults>
</compile_context>

<pallas_src>
import jax
import jax.numpy as jnp
from jax.experimental import pallas as pl
from jax.experimental.pallas import tpu as pltpu


def simple_rnn_kernel(ids_ref,    # (R, 1)  int32, R = 2*Bblk*S, row = t*2*Bblk + side*Bblk + pair
                      embp_ref,   # (Vp, H) f32, emb @ W_ih^T + (b_ih + b_hh), zero-padded vocab
                      whh_ref,    # (H, H)  f32, W_hh^T
                      wAB_ref,    # (2H, H) f32, [weightA; weightB]
                      bbi_ref,    # (1, H)  f32, bilinear bias
                      wout_ref,   # (H, O)  f32, out weight^T
                      bout_ref,   # (1, O)  f32, out bias
                      o_ref):     # (Bblk, O) f32
    R = ids_ref.shape[0]
    Vp = embp_ref.shape[0]
    H = whh_ref.shape[0]
    Bblk = o_ref.shape[0]
    rows = 2 * Bblk               # sequences advanced per recurrence step
    S = R // rows

    # 1) Embedding gather + input projection + RNN bias in ONE MXU matmul:
    #    one_hot(ids, Vp) @ emb_proj.  Padded / out-of-range rows are never
    #    selected (ids < V), so this is an exact gather (no OOB VMEM reads).
    ids = ids_ref[...]                                              # (R, 1)
    iota = jax.lax.broadcasted_iota(jnp.int32, (R, Vp), 1)
    onehot = (iota == ids).astype(jnp.float32)                      # (R, Vp)
    xproj = jnp.dot(onehot, embp_ref[...],
                    preferred_element_type=jnp.float32)             # (R, H), vreg-resident

    # 2) Lock-step recurrence: all 2*Bblk sequences advance together, so the
    #    serially-dependent chain is S matmuls of (2*Bblk, H) @ (H, H).
    whh = whh_ref[...]                                              # hoisted once
    h = jnp.zeros((rows, H), jnp.float32)
    # TODO(synk): switch to lax.fori_loop(..., unroll=True) if S grows beyond ~16.
    for t in range(S):                                              # static unroll (S small)
        h = jnp.tanh(xproj[t * rows:(t + 1) * rows, :]
                     + jnp.dot(h, whh, preferred_element_type=jnp.float32))

    # 3) Double_Linear fused into one matmul, then tanh -> Linear -> sigmoid.
    hcat = jnp.concatenate([h[:Bblk, :], h[Bblk:, :]], axis=1)      # (Bblk, 2H) = [hA | hB]
    biout = jnp.dot(hcat, wAB_ref[...],
                    preferred_element_type=jnp.float32) + bbi_ref[...]
    logits = jnp.dot(jnp.tanh(biout), wout_ref[...],
                     preferred_element_type=jnp.float32) + bout_ref[...]
    o_ref[...] = jax.nn.sigmoid(logits)


def simple_rnn_forward(sentA, sentB, emb_matrix, w_ih, w_hh, b_ih, b_hh,
                       wA, wB, b_bi, w_out, b_out, *, pairs_per_block=8):
    """sentA/sentB: (B, S) int32 token ids. Returns (B, out_dim) f32."""
    B, S = sentA.shape
    assert sentB.shape == (B, S)
    V, E = emb_matrix.shape
    H = w_hh.shape[0]
    O = w_out.shape[0]
    Bblk = min(pairs_per_block, B)
    assert B % Bblk == 0, "pad the pair batch to a multiple of pairs_per_block"
    G = B // Bblk
    rows = 2 * Bblk
    R = rows * S

    # ---- Weight prep (once per weight set) ----
    # Fold the input projection and BOTH RNN biases into the embedding table,
    # then zero-pad the vocab to a lane multiple so the one-hot contraction is
    # cleanly (8,128)-tiled.
    # TODO(synk): for a real vocab (e.g. 50k x 512) this table must stay in HBM
    # (memory_space=pl.ANY) with an in-kernel DMA row-gather instead of being
    # VMEM-resident; at these toy shapes it is a few KiB.
    emb_proj = emb_matrix @ w_ih.T + (b_ih + b_hh)[None, :]         # (V, H)
    Vp = ((V + 127) // 128) * 128
    emb_proj = jnp.pad(emb_proj, ((0, Vp - V), (0, 0)))             # (Vp, H)
    whh_t = w_hh.T                                                  # (H, H)
    wAB = jnp.concatenate([wA, wB], axis=0)                         # (2H, H)
    bbi = b_bi[None, :]                                             # (1, H)
    wout_t = w_out.T                                                # (H, O)
    bout = b_out[None, :]                                           # (1, O)

    # ---- Token-id layout: within grid block g, row = t*2*Bblk + side*Bblk + j ----
    ids = jnp.stack([sentA, sentB], axis=0).astype(jnp.int32)       # (2, B, S)
    ids = jnp.clip(ids, 0, V - 1)                                   # defensive (one-hot zeros OOB anyway)
    ids = ids.reshape(2, G, Bblk, S)
    ids = jnp.transpose(ids, (1, 3, 0, 2))                          # (G, S, 2, Bblk)
    ids = ids.reshape(G * R, 1)

    const = lambda shape: pl.BlockSpec(shape, lambda g: (0,) * len(shape))

    return pl.pallas_call(
        simple_rnn_kernel,
        out_shape=jax.ShapeDtypeStruct((B, O), jnp.float32),
        grid_spec=pltpu.PrefetchScalarGridSpec(
            num_scalar_prefetch=0,
            grid=(G,),                                    # pair-batch axis
            in_specs=[
                pl.BlockSpec((R, 1), lambda g: (g, 0)),   # token ids for this block
                const((Vp, H)),                           # projected embedding table (resident)
                const((H, H)),                            # W_hh^T
                const((2 * H, H)),                        # [weightA; weightB]
                const((1, H)),                            # bilinear bias
                const((H, O)),                            # out weight^T
                const((1, O)),                            # out bias
            ],
            out_specs=pl.BlockSpec((Bblk, O), lambda g: (g, 0)),
        ),
        compiler_params=pltpu.CompilerParams(
            # Pair-batch axis is independent -> shard it across v7x's two TCs.
            dimension_semantics=("parallel",)),
    )(ids, emb_proj, whh_t, wAB, bbi, wout_t, bout)


def reference_forward(sentA, sentB, emb_matrix, w_ih, w_hh, b_ih, b_hh,
                      wA, wB, b_bi, w_out, b_out):
    """Pure-JAX reference with the PyTorch module's per-pair semantics."""
    H = w_hh.shape[0]

    def run_rnn(token_ids):                              # (S,)
        emb = emb_matrix[token_ids]                      # (S, E)
        h = jnp.zeros((1, H), jnp.float32)
        for t in range(emb.shape[0]):
            h = jnp.tanh(emb[t:t + 1] @ w_ih.T + b_ih + h @ w_hh.T + b_hh)
        return h                                         # (1, H)

    outs = []
    for b in range(sentA.shape[0]):
        hA = run_rnn(sentA[b])
        hB = run_rnn(sentB[b])
        biout = hA @ wA + hB @ wB + b_bi[None, :]
        outs.append(jax.nn.sigmoid(jnp.tanh(biout) @ w_out.T + b_out[None, :]))
    return jnp.concatenate(outs, axis=0)                 # (B, O)


if __name__ == "__main__":
    # Small, module-consistent shapes.
    VOCAB, EMB, HID, OUT = 50, 32, 32, 4
    SEQ = 8
    PAIRS = 16            # 16 sentence pairs, 8 per grid block -> grid=(2,)

    key = jax.random.PRNGKey(0)
    keys = jax.random.split(key, 12)

    emb_matrix = jax.random.normal(keys[0], (VOCAB, EMB), jnp.float32) * 0.1
    w_ih = jax.random.uniform(keys[1], (HID, EMB), jnp.float32, -0.1, 0.1)   # nn.RNN weight_ih_l0
    w_hh = jax.random.uniform(keys[2], (HID, HID), jnp.float32, -0.1, 0.1)   # nn.RNN weight_hh_l0
    b_ih = jax.random.uniform(keys[3], (HID,), jnp.float32, -0.1, 0.1)
    b_hh = jax.random.uniform(keys[4], (HID,), jnp.float32, -0.1, 0.1)
    wA = jax.random.uniform(keys[5], (HID, HID), jnp.float32, -0.1, 0.1)     # Double_Linear.weightA
    wB = jax.random.uniform(keys[6], (HID, HID), jnp.float32, -0.1, 0.1)     # Double_Linear.weightB
    b_bi = jax.random.uniform(keys[7], (HID,), jnp.float32, -0.1, 0.1)
    w_out = jax.random.uniform(keys[8], (OUT, HID), jnp.float32, -0.1, 0.1)  # nn.Linear weight
    b_out = jax.random.uniform(keys[9], (OUT,), jnp.float32, -0.1, 0.1)

    sentA = jax.random.randint(keys[10], (PAIRS, SEQ), 0, VOCAB)
    sentB = jax.random.randint(keys[11], (PAIRS, SEQ), 0, VOCAB)

    out = simple_rnn_forward(sentA, sentB, emb_matrix, w_ih, w_hh, b_ih, b_hh,
                             wA, wB, b_bi, w_out, b_out, pairs_per_block=8)
    out = jax.block_until_ready(out)

    ref = reference_forward(sentA, sentB, emb_matrix, w_ih, w_hh, b_ih, b_hh,
                            wA, wB, b_bi, w_out, b_out)

    assert out.shape == (PAIRS, OUT)
    # Tolerance covers MXU f32-pass differences between the fused kernel path
    # and the per-step XLA reference; any logic error would be orders larger.
    assert jnp.allclose(out, ref, atol=1e-3, rtol=1e-3), (out, ref)

    print("KERNEL_OK")
</pallas_src>

<mosaic_0001>
module attributes {stable_mosaic.version = 11 : i64} {
  func.func @simple_rnn_kernel(%arg0: i32, %arg1: memref<128x1xi32, #tpu.memory_space<vmem>>, %arg2: memref<128x32xf32, #tpu.memory_space<vmem>>, %arg3: memref<32x32xf32, #tpu.memory_space<vmem>>, %arg4: memref<64x32xf32, #tpu.memory_space<vmem>>, %arg5: memref<1x32xf32, #tpu.memory_space<vmem>>, %arg6: memref<32x4xf32, #tpu.memory_space<vmem>>, %arg7: memref<1x4xf32, #tpu.memory_space<vmem>>, %arg8: memref<8x4xf32, #tpu.memory_space<vmem>>) attributes {dimension_semantics = [#tpu.dimension_semantics<parallel>], iteration_bounds = array<i64: 2>, scalar_prefetch = 0 : i64, scratch_operands = 0 : i64, tpu.core_type = #tpu.core_type<tc>, window_params = [{transform_indices = @transform_0, window_bounds = array<i64: 128, 1>}, {pipeline_mode = #tpu.pipeline_mode<synchronous>, transform_indices = @transform_1, window_bounds = array<i64: 128, 32>}, {pipeline_mode = #tpu.pipeline_mode<synchronous>, transform_indices = @transform_2, window_bounds = array<i64: 32, 32>}, {pipeline_mode = #tpu.pipeline_mode<synchronous>, transform_indices = @transform_3, window_bounds = array<i64: 64, 32>}, {pipeline_mode = #tpu.pipeline_mode<synchronous>, transform_indices = @transform_4, window_bounds = array<i64: 1, 32>}, {pipeline_mode = #tpu.pipeline_mode<synchronous>, transform_indices = @transform_5, window_bounds = array<i64: 32, 4>}, {pipeline_mode = #tpu.pipeline_mode<synchronous>, transform_indices = @transform_6, window_bounds = array<i64: 1, 4>}, {transform_indices = @transform_7, window_bounds = array<i64: 8, 4>}]} {
    %c0 = arith.constant 0 : index
    %c0_0 = arith.constant 0 : index
    %0 = vector.load %arg1[%c0, %c0_0] : memref<128x1xi32, #tpu.memory_space<vmem>>, vector<128x1xi32>
    %1 = tpu.iota {dimensions = array<i32: 1>} : vector<128x128xi32>
    %2 = vector.broadcast %0 : vector<128x1xi32> to vector<128x128xi32>
    %3 = arith.cmpi eq, %1, %2 : vector<128x128xi32>
    %4 = arith.extui %3 : vector<128x128xi1> to vector<128x128xi32>
    %5 = arith.sitofp %4 : vector<128x128xi32> to vector<128x128xf32>
    %c0_1 = arith.constant 0 : index
    %c0_2 = arith.constant 0 : index
    %6 = vector.load %arg2[%c0_1, %c0_2] : memref<128x32xf32, #tpu.memory_space<vmem>>, vector<128x32xf32>
    %cst = arith.constant dense<0.000000e+00> : vector<128x32xf32>
    %7 = tpu.matmul %5, %6, %cst {dimension_numbers = #tpu.dot_dimension_numbers<[1], [0], [0], [1], [0, 0, 1, 1], [], []>} : vector<128x128xf32>, vector<128x32xf32>, vector<128x32xf32> -> vector<128x32xf32>
    %c0_3 = arith.constant 0 : index
    %c0_4 = arith.constant 0 : index
    %8 = vector.load %arg3[%c0_3, %c0_4] : memref<32x32xf32, #tpu.memory_space<vmem>>, vector<32x32xf32>
    %cst_5 = arith.constant 0.000000e+00 : f32
    %9 = vector.broadcast %cst_5 : f32 to vector<16x32xf32>
    %10 = vector.extract_strided_slice %7 {offsets = [0, 0], sizes = [16, 32], strides = [1, 1]} : vector<128x32xf32> to vector<16x32xf32>
    %cst_6 = arith.constant dense<0.000000e+00> : vector<16x32xf32>
    %11 = tpu.matmul %9, %8, %cst_6 {dimension_numbers = #tpu.dot_dimension_numbers<[1], [0], [0], [1], [0, 0, 1, 1], [], []>} : vector<16x32xf32>, vector<32x32xf32>, vector<16x32xf32> -> vector<16x32xf32>
    %12 = arith.addf %10, %11 : vector<16x32xf32>
    %13 = math.tanh %12 : vector<16x32xf32>
    %14 = vector.extract_strided_slice %7 {offsets = [16, 0], sizes = [16, 32], strides = [1, 1]} : vector<128x32xf32> to vector<16x32xf32>
    %cst_7 = arith.constant dense<0.000000e+00> : vector<16x32xf32>
    %15 = tpu.matmul %13, %8, %cst_7 {dimension_numbers = #tpu.dot_dimension_numbers<[1], [0], [0], [1], [0, 0, 1, 1], [], []>} : vector<16x32xf32>, vector<32x32xf32>, vector<16x32xf32> -> vector<16x32xf32>
    %16 = arith.addf %14, %15 : vector<16x32xf32>
    %17 = math.tanh %16 : vector<16x32xf32>
    %18 = vector.extract_strided_slice %7 {offsets = [32, 0], sizes = [16, 32], strides = [1, 1]} : vector<128x32xf32> to vector<16x32xf32>
    %cst_8 = arith.constant dense<0.000000e+00> : vector<16x32xf32>
    %19 = tpu.matmul %17, %8, %cst_8 {dimension_numbers = #tpu.dot_dimension_numbers<[1], [0], [0], [1], [0, 0, 1, 1], [], []>} : vector<16x32xf32>, vector<32x32xf32>, vector<16x32xf32> -> vector<16x32xf32>
    %20 = arith.addf %18, %19 : vector<16x32xf32>
    %21 = math.tanh %20 : vector<16x32xf32>
    %22 = vector.extract_strided_slice %7 {offsets = [48, 0], sizes = [16, 32], strides = [1, 1]} : vector<128x32xf32> to vector<16x32xf32>
    %cst_9 = arith.constant dense<0.000000e+00> : vector<16x32xf32>
    %23 = tpu.matmul %21, %8, %cst_9 {dimension_numbers = #tpu.dot_dimension_numbers<[1], [0], [0], [1], [0, 0, 1, 1], [], []>} : vector<16x32xf32>, vector<32x32xf32>, vector<16x32xf32> -> vector<16x32xf32>
    %24 = arith.addf %22, %23 : vector<16x32xf32>
    %25 = math.tanh %24 : vector<16x32xf32>
    %26 = vector.extract_strided_slice %7 {offsets = [64, 0], sizes = [16, 32], strides = [1, 1]} : vector<128x32xf32> to vector<16x32xf32>
    %cst_10 = arith.constant dense<0.000000e+00> : vector<16x32xf32>
    %27 = tpu.matmul %25, %8, %cst_10 {dimension_numbers = #tpu.dot_dimension_numbers<[1], [0], [0], [1], [0, 0, 1, 1], [], []>} : vector<16x32xf32>, vector<32x32xf32>, vector<16x32xf32> -> vector<16x32xf32>
    %28 = arith.addf %26, %27 : vector<16x32xf32>
    %29 = math.tanh %28 : vector<16x32xf32>
    %30 = vector.extract_strided_slice %7 {offsets = [80, 0], sizes = [16, 32], strides = [1, 1]} : vector<128x32xf32> to vector<16x32xf32>
    %cst_11 = arith.constant dense<0.000000e+00> : vector<16x32xf32>
    %31 = tpu.matmul %29, %8, %cst_11 {dimension_numbers = #tpu.dot_dimension_numbers<[1], [0], [0], [1], [0, 0, 1, 1], [], []>} : vector<16x32xf32>, vector<32x32xf32>, vector<16x32xf32> -> vector<16x32xf32>
    %32 = arith.addf %30, %31 : vector<16x32xf32>
    %33 = math.tanh %32 : vector<16x32xf32>
    %34 = vector.extract_strided_slice %7 {offsets = [96, 0], sizes = [16, 32], strides = [1, 1]} : vector<128x32xf32> to vector<16x32xf32>
    %cst_12 = arith.constant dense<0.000000e+00> : vector<16x32xf32>
    %35 = tpu.matmul %33, %8, %cst_12 {dimension_numbers = #tpu.dot_dimension_numbers<[1], [0], [0], [1], [0, 0, 1, 1], [], []>} : vector<16x32xf32>, vector<32x32xf32>, vector<16x32xf32> -> vector<16x32xf32>
    %36 = arith.addf %34, %35 : vector<16x32xf32>
    %37 = math.tanh %36 : vector<16x32xf32>
    %38 = vector.extract_strided_slice %7 {offsets = [112, 0], sizes = [16, 32], strides = [1, 1]} : vector<128x32xf32> to vector<16x32xf32>
    %cst_13 = arith.constant dense<0.000000e+00> : vector<16x32xf32>
    %39 = tpu.matmul %37, %8, %cst_13 {dimension_numbers = #tpu.dot_dimension_numbers<[1], [0], [0], [1], [0, 0, 1, 1], [], []>} : vector<16x32xf32>, vector<32x32xf32>, vector<16x32xf32> -> vector<16x32xf32>
    %40 = arith.addf %38, %39 : vector<16x32xf32>
    %41 = math.tanh %40 : vector<16x32xf32>
    %42 = vector.extract_strided_slice %41 {offsets = [0, 0], sizes = [8, 32], strides = [1, 1]} : vector<16x32xf32> to vector<8x32xf32>
    %43 = vector.extract_strided_slice %41 {offsets = [8, 0], sizes = [8, 32], strides = [1, 1]} : vector<16x32xf32> to vector<8x32xf32>
    %44 = tpu.concatenate %42, %43 in 1 : vector<8x32xf32>, vector<8x32xf32> -> vector<8x64xf32>
    %c0_14 = arith.constant 0 : index
    %c0_15 = arith.constant 0 : index
    %45 = vector.load %arg4[%c0_14, %c0_15] : memref<64x32xf32, #tpu.memory_space<vmem>>, vector<64x32xf32>
    %cst_16 = arith.constant dense<0.000000e+00> : vector<8x32xf32>
    %46 = tpu.matmul %44, %45, %cst_16 {dimension_numbers = #tpu.dot_dimension_numbers<[1], [0], [0], [1], [0, 0, 1, 1], [], []>} : vector<8x64xf32>, vector<64x32xf32>, vector<8x32xf32> -> vector<8x32xf32>
    %c0_17 = arith.constant 0 : index
    %c0_18 = arith.constant 0 : index
    %47 = vector.load %arg5[%c0_17, %c0_18] : memref<1x32xf32, #tpu.memory_space<vmem>>, vector<1x32xf32>
    %48 = vector.broadcast %47 : vector<1x32xf32> to vector<8x32xf32>
    %49 = arith.addf %46, %48 : vector<8x32xf32>
    %50 = math.tanh %49 : vector<8x32xf32>
    %c0_19 = arith.constant 0 : index
    %c0_20 = arith.constant 0 : index
    %51 = vector.load %arg6[%c0_19, %c0_20] : memref<32x4xf32, #tpu.memory_space<vmem>>, vector<32x4xf32>
    %cst_21 = arith.constant dense<0.000000e+00> : vector<8x4xf32>
    %52 = tpu.matmul %50, %51, %cst_21 {dimension_numbers = #tpu.dot_dimension_numbers<[1], [0], [0], [1], [0, 0, 1, 1], [], []>} : vector<8x32xf32>, vector<32x4xf32>, vector<8x4xf32> -> vector<8x4xf32>
    %c0_22 = arith.constant 0 : index
    %c0_23 = arith.constant 0 : index
    %53 = vector.load %arg7[%c0_22, %c0_23] : memref<1x4xf32, #tpu.memory_space<vmem>>, vector<1x4xf32>
    %54 = vector.broadcast %53 : vector<1x4xf32> to vector<8x4xf32>
    %55 = arith.addf %52, %54 : vector<8x4xf32>
    %56 = arith.negf %55 : vector<8x4xf32>
    %57 = math.exp %56 : vector<8x4xf32>
    %cst_24 = arith.constant 1.000000e+00 : f32
    %58 = vector.broadcast %cst_24 : f32 to vector<8x4xf32>
    %59 = arith.addf %58, %57 : vector<8x4xf32>
    %60 = arith.divf %58, %59 : vector<8x4xf32>
    %c0_25 = arith.constant 0 : index
    %c0_26 = arith.constant 0 : index
    %61 = vector.load %arg8[%c0_25, %c0_26] : memref<8x4xf32, #tpu.memory_space<vmem>>, vector<8x4xf32>
    tpu.vector_store %arg8[%c0_25, %c0_26], %60 {strides = array<i32>} : memref<8x4xf32, #tpu.memory_space<vmem>>, vector<8x4xf32>,
    return
  }
  func.func @transform_0(%arg0: i32) -> (i32, i32) {
    %c0_i32 = arith.constant 0 : i32
    %c0_i32_0 = arith.constant 0 : i32
    return %arg0, %c0_i32 : i32, i32
  }
  func.func @transform_1(%arg0: i32) -> (i32, i32) {
    %c0_i32 = arith.constant 0 : i32
    %c0_i32_0 = arith.constant 0 : i32
    %c0_i32_1 = arith.constant 0 : i32
    return %c0_i32, %c0_i32_0 : i32, i32
  }
  func.func @transform_2(%arg0: i32) -> (i32, i32) {
    %c0_i32 = arith.constant 0 : i32
    %c0_i32_0 = arith.constant 0 : i32
    %c0_i32_1 = arith.constant 0 : i32
    return %c0_i32, %c0_i32_0 : i32, i32
  }
  func.func @transform_3(%arg0: i32) -> (i32, i32) {
    %c0_i32 = arith.constant 0 : i32
    %c0_i32_0 = arith.constant 0 : i32
    %c0_i32_1 = arith.constant 0 : i32
    return %c0_i32, %c0_i32_0 : i32, i32
  }
  func.func @transform_4(%arg0: i32) -> (i32, i32) {
    %c0_i32 = arith.constant 0 : i32
    %c0_i32_0 = arith.constant 0 : i32
    %c0_i32_1 = arith.constant 0 : i32
    return %c0_i32, %c0_i32_0 : i32, i32
  }
  func.func @transform_5(%arg0: i32) -> (i32, i32) {
    %c0_i32 = arith.constant 0 : i32
    %c0_i32_0 = arith.constant 0 : i32
    %c0_i32_1 = arith.constant 0 : i32
    return %c0_i32, %c0_i32_0 : i32, i32
  }
  func.func @transform_6(%arg0: i32) -> (i32, i32) {
    %c0_i32 = arith.constant 0 : i32
    %c0_i32_0 = arith.constant 0 : i32
    %c0_i32_1 = arith.constant 0 : i32
    return %c0_i32, %c0_i32_0 : i32, i32
  }
  func.func @transform_7(%arg0: i32) -> (i32, i32) {
    %c0_i32 = arith.constant 0 : i32
    %c0_i32_0 = arith.constant 0 : i32
    return %arg0, %c0_i32 : i32, i32
  }
}

</mosaic_0001>

<llo_original>
// kernel: tpu_custom_call.1
$region0: #{tpu_custom_call.1}
  #allocation0 [shape = 'u32[]', space=smem, size = 0x4, offset = 0x4, fixed_abs, tag = 'smem constant byte address 0x4 - core index']
  #allocation1 [shape = 'u32[144,128]{1,0:T(1,128)}', space=vmem, size = 0x12000, scoped, tag = 'internal scratch']
  %s0 = inlined_call_operand.vmem [shape: s32[256,1], index: 0, kind: input, shape index: {}]
  %s1 = inlined_call_operand.vmem [shape: f32[128,32], index: 1, kind: input, shape index: {}]
  %s2 = inlined_call_operand.vmem [shape: f32[32,32], index: 2, kind: input, shape index: {}]
  %s3 = inlined_call_operand.vmem [shape: f32[64,32], index: 3, kind: input, shape index: {}]
  %s4 = inlined_call_operand.vmem [shape: f32[1,32], index: 4, kind: input, shape index: {}]
  %s5 = inlined_call_operand.vmem [shape: f32[32,4], index: 5, kind: input, shape index: {}]
  %s6 = inlined_call_operand.vmem [shape: f32[1,4], index: 6, kind: input, shape index: {}]
  %s7 = inlined_call_operand.vmem [shape: f32[16,4], index: 7, kind: output, shape index: {}]
  %s8 = sld [smem:[#allocation0]]
  $region61: #{tpu_custom_call.1} parent=0
    _
  %s10 = ssub.s32 1, %s8
  %s11 = scalar_select 0, %s10, %s8
  loop: start=0, step=1, limit=4
  $region2: #{tpu_custom_call.1} parent=0 // loop_pre_header
    _
  $region3: #{tpu_custom_call.1} parent=0 // loop_header
    %s13 = sphi 0, %s17
    %p14 = scmp.ge.s32.totalorder %s13, 4
    %s23 = sphi 0, %s25
    %s26 = sphi 0, %s23
    %s27 = sphi 0, %s26
    %s43 = sphi 0, %s27
    %s47 = sphi 0, %s47
    %s49 = sphi 0, %s47
    %s50 = sphi 0, %s49
    %s64 = sphi 0, %s50
    %s68 = sphi 0, %s68
    %s70 = sphi 0, %s68
    %s71 = sphi 0, %s70
    %s85 = sphi 0, %s71
    %s89 = sphi 0, %s89
    %s91 = sphi 0, %s89
    %s92 = sphi 0, %s91
    %s106 = sphi 0, %s92
    %s110 = sphi 0, %s110
    %s112 = sphi 0, %s110
    %s113 = sphi 0, %s112
    %s127 = sphi 0, %s113
    %s131 = sphi 0, %s131
    %s133 = sphi 0, %s131
    %s134 = sphi 0, %s133
    %s148 = sphi 0, %s134
    %s152 = sphi 0, %s152
    %s154 = sphi 0, %s152
    %s155 = sphi 0, %s154
    %s169 = sphi 0, %s155
    %s175 = sphi 0, %s177
    %s178 = sphi 0, %s175
    %s179 = sphi 0, %s178
    %s195 = sphi 0, %s179
  $region4: #{tpu_custom_call.1} parent=0 // loop_header_branch
    %16 = sbr.rel (%p14) target = $region8
  $region5: #{tpu_custom_call.1} parent=0 // loop_body
    %s18 = ssub.s32 %s13, 1
    %s19 = ssub.s32 %s13, 2
    %s20 = sadd.s32 %s13, 1
    %s21 = ssub.s32 %s13, %s20
    %p22 = scmp.eq.s32.totalorder %s21, 0
    %s24 = sadd.s32 %s23, 1
    %s25 = scalar_select %p22, %s23, %s24
    %p28 = pneg %p22
    %p29 = scmp.eq.s32.totalorder %s13, 1
    %p30 = por %p28, %p29
    %p31 = scmp.ne.s32.totalorder %s23, %s26
    %p32 = scmp.eq.s32.totalorder %s13, 0
    %p33 = por %p31, %p32
    %p34 = scmp.ne.s32.totalorder %s23, %s26
    %p35 = scmp.eq.s32.totalorder %s18, 1
    %p36 = por %p34, %p35
    %p37 = scmp.ne.s32.totalorder %s26, %s27
    %p38 = scmp.eq.s32.totalorder %s18, 0
    %p39 = por %p37, %p38
    %p40 = scmp.ne.s32.totalorder %s26, %s27
    %p41 = scmp.eq.s32.totalorder %s19, 1
    %p42 = por %p40, %p41
    %p44 = scmp.ne.s32.totalorder %s27, %s43
    %p45 = scmp.eq.s32.totalorder %s19, 0
    %p46 = por %p44, %p45
    %s48 = sadd.s32 %s47, 1
    %p51 = scmp.eq.s32.totalorder %s13, 1
    %p52 = scmp.ne.s32.totalorder %s47, %s49
    %p53 = scmp.eq.s32.totalorder %s13, 0
    %p54 = por %p52, %p53
    %p55 = scmp.ne.s32.totalorder %s47, %s49
    %p56 = scmp.eq.s32.totalorder %s18, 1
    %p57 = por %p55, %p56
    %p58 = scmp.ne.s32.totalorder %s49, %s50
    %p59 = scmp.eq.s32.totalorder %s18, 0
    %p60 = por %p58, %p59
    %p61 = scmp.ne.s32.totalorder %s49, %s50
    %p62 = scmp.eq.s32.totalorder %s19, 1
    %p63 = por %p61, %p62
    %p65 = scmp.ne.s32.totalorder %s50, %s64
    %p66 = scmp.eq.s32.totalorder %s19, 0
    %p67 = por %p65, %p66
    %s69 = sadd.s32 %s68, 1
    %p72 = scmp.eq.s32.totalorder %s13, 1
    %p73 = scmp.ne.s32.totalorder %s68, %s70
    %p74 = scmp.eq.s32.totalorder %s13, 0
    %p75 = por %p73, %p74
    %p76 = scmp.ne.s32.totalorder %s68, %s70
    %p77 = scmp.eq.s32.totalorder %s18, 1
    %p78 = por %p76, %p77
    %p79 = scmp.ne.s32.totalorder %s70, %s71
    %p80 = scmp.eq.s32.totalorder %s18, 0
    %p81 = por %p79, %p80
    %p82 = scmp.ne.s32.totalorder %s70, %s71
    %p83 = scmp.eq.s32.totalorder %s19, 1
    %p84 = por %p82, %p83
    %p86 = scmp.ne.s32.totalorder %s71, %s85
    %p87 = scmp.eq.s32.totalorder %s19, 0
    %p88 = por %p86, %p87
    %s90 = sadd.s32 %s89, 1
    %p93 = scmp.eq.s32.totalorder %s13, 1
    %p94 = scmp.ne.s32.totalorder %s89, %s91
    %p95 = scmp.eq.s32.totalorder %s13, 0
    %p96 = por %p94, %p95
    %p97 = scmp.ne.s32.totalorder %s89, %s91
    %p98 = scmp.eq.s32.totalorder %s18, 1
    %p99 = por %p97, %p98
    %p100 = scmp.ne.s32.totalorder %s91, %s92
    %p101 = scmp.eq.s32.totalorder %s18, 0
    %p102 = por %p100, %p101
    %p103 = scmp.ne.s32.totalorder %s91, %s92
    %p104 = scmp.eq.s32.totalorder %s19, 1
    %p105 = por %p103, %p104
    %p107 = scmp.ne.s32.totalorder %s92, %s106
    %p108 = scmp.eq.s32.totalorder %s19, 0
    %p109 = por %p107, %p108
    %s111 = sadd.s32 %s110, 1
    %p114 = scmp.eq.s32.totalorder %s13, 1
    %p115 = scmp.ne.s32.totalorder %s110, %s112
    %p116 = scmp.eq.s32.totalorder %s13, 0
    %p117 = por %p115, %p116
    %p118 = scmp.ne.s32.totalorder %s110, %s112
    %p119 = scmp.eq.s32.totalorder %s18, 1
    %p120 = por %p118, %p119
    %p121 = scmp.ne.s32.totalorder %s112, %s113
    %p122 = scmp.eq.s32.totalorder %s18, 0
    %p123 = por %p121, %p122
    %p124 = scmp.ne.s32.totalorder %s112, %s113
    %p125 = scmp.eq.s32.totalorder %s19, 1
    %p126 = por %p124, %p125
    %p128 = scmp.ne.s32.totalorder %s113, %s127
    %p129 = scmp.eq.s32.totalorder %s19, 0
    %p130 = por %p128, %p129
    %s132 = sadd.s32 %s131, 1
    %p135 = scmp.eq.s32.totalorder %s13, 1
    %p136 = scmp.ne.s32.totalorder %s131, %s133
    %p137 = scmp.eq.s32.totalorder %s13, 0
    %p138 = por %p136, %p137
    %p139 = scmp.ne.s32.totalorder %s131, %s133
    %p140 = scmp.eq.s32.totalorder %s18, 1
    %p141 = por %p139, %p140
    %p142 = scmp.ne.s32.totalorder %s133, %s134
    %p143 = scmp.eq.s32.totalorder %s18, 0
    %p144 = por %p142, %p143
    %p145 = scmp.ne.s32.totalorder %s133, %s134
    %p146 = scmp.eq.s32.totalorder %s19, 1
    %p147 = por %p145, %p146
    %p149 = scmp.ne.s32.totalorder %s134, %s148
    %p150 = scmp.eq.s32.totalorder %s19, 0
    %p151 = por %p149, %p150
    %s153 = sadd.s32 %s152, 1
    %p156 = scmp.eq.s32.totalorder %s13, 1
    %p157 = scmp.ne.s32.totalorder %s152, %s154
    %p158 = scmp.eq.s32.totalorder %s13, 0
    %p159 = por %p157, %p158
    %p160 = scmp.ne.s32.totalorder %s152, %s154
    %p161 = scmp.eq.s32.totalorder %s18, 1
    %p162 = por %p160, %p161
    %p163 = scmp.ne.s32.totalorder %s154, %s155
    %p164 = scmp.eq.s32.totalorder %s18, 0
    %p165 = por %p163, %p164
    %p166 = scmp.ne.s32.totalorder %s154, %s155
    %p167 = scmp.eq.s32.totalorder %s19, 1
    %p168 = por %p166, %p167
    %p170 = scmp.ne.s32.totalorder %s155, %s169
    %p171 = scmp.eq.s32.totalorder %s19, 0
    %p172 = por %p170, %p171
    %s173 = ssub.s32 %s13, %s20
    %p174 = scmp.eq.s32.totalorder %s173, 0
    %s176 = sadd.s32 %s175, 1
    %s177 = scalar_select %p174, %s175, %s176
    %p180 = pneg %p174
    %p181 = scmp.eq.s32.totalorder %s13, 1
    %p182 = por %p180, %p181
    %p183 = scmp.ne.s32.totalorder %s175, %s178
    %p184 = scmp.eq.s32.totalorder %s13, 0
    %p185 = por %p183, %p184
    %p186 = scmp.ne.s32.totalorder %s175, %s178
    %p187 = scmp.eq.s32.totalorder %s18, 1
    %p188 = por %p186, %p187
    %p189 = scmp.ne.s32.totalorder %s178, %s179
    %p190 = scmp.eq.s32.totalorder %s18, 0
    %p191 = por %p189, %p190
    %p192 = scmp.ne.s32.totalorder %s178, %s179
    %p193 = scmp.eq.s32.totalorder %s19, 1
    %p194 = por %p192, %p193
    %p196 = scmp.ne.s32.totalorder %s179, %s195
    %p197 = scmp.eq.s32.totalorder %s19, 0
    %p198 = por %p196, %p197
    %p199 = scmp.le.s32.totalorder 1, %s13
    %p200 = scmp.lt.s32.totalorder %s13, 3
    %p201 = pnand %p199, %p200
    %p202 = pneg %p201
    // Predicated region
    $region9: #{tpu_custom_call.1} parent=5 // pred_check
      _
    $region10: #{tpu_custom_call.1} parent=5 // pred_check_branch
      %204 = sbr.rel (%p201) target = $region12
    $region11: #{tpu_custom_call.1} parent=5 // pred_region
      %s205 = ssub.s32 %s13, 1
      // Predicated region
      $region13: #{tpu_custom_call.1} parent=11 // pred_check
        %p206 = pneg %p60
      $region14: #{tpu_custom_call.1} parent=11 // pred_check_branch
        %208 = sbr.rel (%p206) target = $region16
      $region15: #{tpu_custom_call.1} parent=11 // pred_region
        _
      $region16: #{tpu_custom_call.1} parent=11 // pred_fallthru
        _
      // Predicated region
      $region17: #{tpu_custom_call.1} parent=11 // pred_check
        %p209 = pneg %p81
      $region18: #{tpu_custom_call.1} parent=11 // pred_check_branch
        %211 = sbr.rel (%p209) target = $region20
      $region19: #{tpu_custom_call.1} parent=11 // pred_region
        _
      $region20: #{tpu_custom_call.1} parent=11 // pred_fallthru
        _
      // Predicated region
      $region21: #{tpu_custom_call.1} parent=11 // pred_check
        %p212 = pneg %p102
      $region22: #{tpu_custom_call.1} parent=11 // pred_check_branch
        %214 = sbr.rel (%p212) target = $region24
      $region23: #{tpu_custom_call.1} parent=11 // pred_region
        _
      $region24: #{tpu_custom_call.1} parent=11 // pred_fallthru
        _
      // Predicated region
      $region25: #{tpu_custom_call.1} parent=11 // pred_check
        %p215 = pneg %p123
      $region26: #{tpu_custom_call.1} parent=11 // pred_check_branch
        %217 = sbr.rel (%p215) target = $region28
      $region27: #{tpu_custom_call.1} parent=11 // pred_region
        _
      $region28: #{tpu_custom_call.1} parent=11 // pred_fallthru
        _
      // Predicated region
      $region29: #{tpu_custom_call.1} parent=11 // pred_check
        %p218 = pneg %p144
      $region30: #{tpu_custom_call.1} parent=11 // pred_check_branch
        %220 = sbr.rel (%p218) target = $region32
      $region31: #{tpu_custom_call.1} parent=11 // pred_region
        _
      $region32: #{tpu_custom_call.1} parent=11 // pred_fallthru
        _
      // Predicated region
      $region33: #{tpu_custom_call.1} parent=11 // pred_check
        %p221 = pneg %p165
      $region34: #{tpu_custom_call.1} parent=11 // pred_check_branch
        %223 = sbr.rel (%p221) target = $region36
      $region35: #{tpu_custom_call.1} parent=11 // pred_region
        _
      $region36: #{tpu_custom_call.1} parent=11 // pred_fallthru
        _
    $region12: #{tpu_custom_call.1} parent=5 // pred_fallthru
      _
    %p224 = scmp.lt.s32.totalorder %s13, 2
    // Predicated region
    $region37: #{tpu_custom_call.1} parent=5 // pred_check
      %p225 = pneg %p224
    $region38: #{tpu_custom_call.1} parent=5 // pred_check_branch
      %227 = sbr.rel (%p225) target = $region40
    $region39: #{tpu_custom_call.1} parent=5 // pred_region
      // Predicated region
      $region41: #{tpu_custom_call.1} parent=39 // pred_check
        %p228 = pneg %p33
      $region42: #{tpu_custom_call.1} parent=39 // pred_check_branch
        %230 = sbr.rel (%p228) target = $region44
      $region43: #{tpu_custom_call.1} parent=39 // pred_region
        %s231 = smul.u32 16, %s13
        %p232 = scmp.lt.s32.totalorder %s231, 31
        %s233 = scalar_select %p232, %s231, 31
        %s234 = smul.addr %s233, 8
        %s235 = scalar_lea.vmem %s0, %s234
        %s236 = smul.u32 16, %s13
      $region44: #{tpu_custom_call.1} parent=39 // pred_fallthru
        _
    $region40: #{tpu_custom_call.1} parent=5 // pred_fallthru
      _
    %p237 = scmp.le.s32.totalorder 1, %s13
    %p238 = scmp.lt.s32.totalorder %s13, 3
    %p239 = pnand %p237, %p238
    %p240 = pneg %p239
    // Predicated region
    $region45: #{tpu_custom_call.1} parent=5 // pred_check
      _
    $region46: #{tpu_custom_call.1} parent=5 // pred_check_branch
      %242 = sbr.rel (%p239) target = $region48
    $region47: #{tpu_custom_call.1} parent=5 // pred_region
      %s243 = ssub.s32 %s13, 1
      %s244 = smul.u32 16, %s18
      %p245 = scmp.lt.s32.totalorder %s244, 31
      %s246 = scalar_select %p245, %s244, 31
      %s247 = smul.addr %s246, 8
      %s248 = scalar_lea.vmem %s0, %s247
      %p249 = pneg %p39
      %p250 = pneg %p36
      %p251 = pneg %p60
      %p252 = pneg %p57
      %p253 = pneg %p81
      %p254 = pneg %p78
      %p255 = pneg %p102
      %p256 = pneg %p99
      %p257 = pneg %p123
      %p258 = pneg %p120
      %p259 = pneg %p144
      %p260 = pneg %p141
      %p261 = pneg %p165
      %p262 = pneg %p162
      %p263 = pneg %p191
      %p264 = pneg %p188
      %p265 = scmp.lt.s32.totalorder %s18, 1
      %s266 = scalar_select %p265, %s18, 1
      %s267 = smul.addr %s266, 8
      %s268 = scalar_lea.vmem %s7, %s267
      %s269 = smul.u32 16, %s18
      %p270 = scmp.lt.s32.totalorder %s269, 31
      %s271 = scalar_select %p270, %s269, 31
      %s272 = smul.addr %s271, 8
      %s273 = scalar_lea.vmem %s0, %s272
      %s274 = smul.u32 16, %s18
      %p275 = scmp.lt.s32.totalorder %s18, 1
      %s276 = scalar_select %p275, %s18, 1
      %s277 = smul.addr %s276, 8
      %s278 = scalar_lea.vmem %s7, %s277
      %v279 = vld [vmem:[%s273] sm:$0xff]
      %v280 = vld [vmem:[%s273 + $0x8] sm:$0xff]
      %v281 = vld [vmem:[%s273 + $0x10] sm:$0xff]
      %v282 = vld [vmem:[%s273 + $0x18] sm:$0xff]
      %v283 = vld [vmem:[%s273 + $0x20] sm:$0xff]
      %v284 = vld [vmem:[%s273 + $0x28] sm:$0xff]
      %v285 = vld [vmem:[%s273 + $0x30] sm:$0xff]
      %v286 = vld [vmem:[%s273 + $0x38] sm:$0xff]
      %v287 = vld [vmem:[%s273 + $0x40] sm:$0xff]
      %v288 = vld [vmem:[%s273 + $0x48] sm:$0xff]
      %v289 = vld [vmem:[%s273 + $0x50] sm:$0xff]
      %v290 = vld [vmem:[%s273 + $0x58] sm:$0xff]
      %v291 = vld [vmem:[%s273 + $0x60] sm:$0xff]
      %v292 = vld [vmem:[%s273 + $0x68] sm:$0xff]
      %v293 = vld [vmem:[%s273 + $0x70] sm:$0xff]
      %v294 = vld [vmem:[%s273 + $0x78] sm:$0xff]
      %v295 = vlaneseq
      %v296 = vand.u32 %v295, 127
      %297 = vset.pattern.permute.xlu0 0
      %298 = vperm.xlu0 %297, %v279
      %v299 = vpop.permute.xlu0 %298
      %300 = vset.pattern.permute.xlu0 0
      %301 = vperm.xlu0 %300, %v280
      %v302 = vpop.permute.xlu0 %301
      %303 = vset.pattern.permute.xlu0 0
      %304 = vperm.xlu0 %303, %v281
      %v305 = vpop.permute.xlu0 %304
      %306 = vset.pattern.permute.xlu0 0
      %307 = vperm.xlu0 %306, %v282
      %v308 = vpop.permute.xlu0 %307
      %309 = vset.pattern.permute.xlu0 0
      %310 = vperm.xlu0 %309, %v283
      %v311 = vpop.permute.xlu0 %310
      %312 = vset.pattern.permute.xlu0 0
      %313 = vperm.xlu0 %312, %v284
      %v314 = vpop.permute.xlu0 %313
      %315 = vset.pattern.permute.xlu0 0
      %316 = vperm.xlu0 %315, %v285
      %v317 = vpop.permute.xlu0 %316
      %318 = vset.pattern.permute.xlu0 0
      %319 = vperm.xlu0 %318, %v286
      %v320 = vpop.permute.xlu0 %319
      %321 = vset.pattern.permute.xlu0 0
      %322 = vperm.xlu0 %321, %v287
      %v323 = vpop.permute.xlu0 %322
      %324 = vset.pattern.permute.xlu0 0
      %325 = vperm.xlu0 %324, %v288
      %v326 = vpop.permute.xlu0 %325
      %327 = vset.pattern.permute.xlu0 0
      %328 = vperm.xlu0 %327, %v289
      %v329 = vpop.permute.xlu0 %328
      %330 = vset.pattern.permute.xlu0 0
      %331 = vperm.xlu0 %330, %v290
      %v332 = vpop.permute.xlu0 %331
      %333 = vset.pattern.permute.xlu0 0
      %334 = vperm.xlu0 %333, %v291
      %v335 = vpop.permute.xlu0 %334
      %336 = vset.pattern.permute.xlu0 0
      %337 = vperm.xlu0 %336, %v292
      %v338 = vpop.permute.xlu0 %337
      %339 = vset.pattern.permute.xlu0 0
      %340 = vperm.xlu0 %339, %v293
      %v341 = vpop.permute.xlu0 %340
      %342 = vset.pattern.permute.xlu0 0
      %343 = vperm.xlu0 %342, %v294
      %v344 = vpop.permute.xlu0 %343
      %vm345 = vcmp.eq.s32.totalorder %v296, %v299
      %vm346 = vcmp.eq.s32.totalorder %v296, %v302
      %vm347 = vcmp.eq.s32.totalorder %v296, %v305
      %vm348 = vcmp.eq.s32.totalorder %v296, %v308
      %vm349 = vcmp.eq.s32.totalorder %v296, %v311
      %vm350 = vcmp.eq.s32.totalorder %v296, %v314
      %vm351 = vcmp.eq.s32.totalorder %v296, %v317
      %vm352 = vcmp.eq.s32.totalorder %v296, %v320
      %vm353 = vcmp.eq.s32.totalorder %v296, %v323
      %vm354 = vcmp.eq.s32.totalorder %v296, %v326
      %vm355 = vcmp.eq.s32.totalorder %v296, %v329
      %vm356 = vcmp.eq.s32.totalorder %v296, %v332
      %vm357 = vcmp.eq.s32.totalorder %v296, %v335
      %vm358 = vcmp.eq.s32.totalorder %v296, %v338
      %vm359 = vcmp.eq.s32.totalorder %v296, %v341
      %vm360 = vcmp.eq.s32.totalorder %v296, %v344
      %v361 = vsel %vm345, 1, 0
      %v362 = vsel %vm346, 1, 0
      %v363 = vsel %vm347, 1, 0
      %v364 = vsel %vm348, 1, 0
      %v365 = vsel %vm349, 1, 0
      %v366 = vsel %vm350, 1, 0
      %v367 = vsel %vm351, 1, 0
      %v368 = vsel %vm352, 1, 0
      %v369 = vsel %vm353, 1, 0
      %v370 = vsel %vm354, 1, 0
      %v371 = vsel %vm355, 1, 0
      %v372 = vsel %vm356, 1, 0
      %v373 = vsel %vm357, 1, 0
      %v374 = vsel %vm358, 1, 0
      %v375 = vsel %vm359, 1, 0
      %v376 = vsel %vm360, 1, 0
      %v377 = vcvt.s32.f32 %v361
      %v378 = vcvt.s32.f32 %v362
      %v379 = vcvt.s32.f32 %v363
      %v380 = vcvt.s32.f32 %v364
      %v381 = vcvt.s32.f32 %v365
      %v382 = vcvt.s32.f32 %v366
      %v383 = vcvt.s32.f32 %v367
      %v384 = vcvt.s32.f32 %v368
      %v385 = vcvt.s32.f32 %v369
      %v386 = vcvt.s32.f32 %v370
      %v387 = vcvt.s32.f32 %v371
      %v388 = vcvt.s32.f32 %v372
      %v389 = vcvt.s32.f32 %v373
      %v390 = vcvt.s32.f32 %v374
      %v391 = vcvt.s32.f32 %v375
      %v392 = vcvt.s32.f32 %v376
      %v393 = vld [vmem:[%s1] sm:$0xff]
      %v394 = vld [vmem:[%s1 + $0x8] sm:$0xff]
      %v395 = vld [vmem:[%s1 + $0x10] sm:$0xff]
      %v396 = vld [vmem:[%s1 + $0x18] sm:$0xff]
      %v397 = vld [vmem:[%s1 + $0x20] sm:$0xff]
      %v398 = vld [vmem:[%s1 + $0x28] sm:$0xff]
      %v399 = vld [vmem:[%s1 + $0x30] sm:$0xff]
      %v400 = vld [vmem:[%s1 + $0x38] sm:$0xff]
      %v401 = vld [vmem:[%s1 + $0x40] sm:$0xff]
      %v402 = vld [vmem:[%s1 + $0x48] sm:$0xff]
      %v403 = vld [vmem:[%s1 + $0x50] sm:$0xff]
      %v404 = vld [vmem:[%s1 + $0x58] sm:$0xff]
      %v405 = vld [vmem:[%s1 + $0x60] sm:$0xff]
      %v406 = vld [vmem:[%s1 + $0x68] sm:$0xff]
      %v407 = vld [vmem:[%s1 + $0x70] sm:$0xff]
      %v408 = vld [vmem:[%s1 + $0x78] sm:$0xff]
      %409 = vmatprep.subr.mxu0 0.0
      %410 = vmatpush1.msra.mxu0 %v393
      %411 = vmatprep.subr.mxu0 0.0
      %412 = vmatpush1.msra.mxu0 %v394
      %413 = vmatprep.subr.mxu0 0.0
      %414 = vmatpush1.msra.mxu0 %v395
      %415 = vmatprep.subr.mxu0 0.0
      %416 = vmatpush1.msra.mxu0 %v396
      %417 = vmatprep.subr.mxu0 0.0
      %418 = vmatpush1.msra.mxu0 %v397
      %419 = vmatprep.subr.mxu0 0.0
      %420 = vmatpush1.msra.mxu0 %v398
      %421 = vmatprep.subr.mxu0 0.0
      %422 = vmatpush1.msra.mxu0 %v399
      %423 = vmatprep.subr.mxu0 0.0
      %424 = vmatpush1.msra.mxu0 %v400
      %425 = vmatprep.subr.mxu0 0.0
      %426 = vmatpush1.msra.mxu0 %v401
      %427 = vmatprep.subr.mxu0 0.0
      %428 = vmatpush1.msra.mxu0 %v402
      %429 = vmatprep.subr.mxu0 0.0
      %430 = vmatpush1.msra.mxu0 %v403
      %431 = vmatprep.subr.mxu0 0.0
      %432 = vmatpush1.msra.mxu0 %v404
      %433 = vmatprep.subr.mxu0 0.0
      %434 = vmatpush1.msra.mxu0 %v405
      %435 = vmatprep.subr.mxu0 0.0
      %436 = vmatpush1.msra.mxu0 %v406
      %437 = vmatprep.subr.mxu0 0.0
      %438 = vmatpush1.msra.mxu0 %v407
      %439 = vmatprep.subr.mxu0 0.0
      %440 = vmatpush1.msra.mxu0 %v408
      %441 = vmatprep.subr.mxu0 0.0
      %442 = vmatpush1.msra.mxu0 0.0
      %443 = vmatprep.subr.mxu0 0.0
      %444 = vmatpush1.msra.mxu0 0.0
      %445 = vmatprep.subr.mxu0 0.0
      %446 = vmatpush1.msra.mxu0 0.0
      %447 = vmatprep.subr.mxu0 0.0
      %448 = vmatpush1.msra.mxu0 0.0
      %449 = vmatprep.subr.mxu0 0.0
      %450 = vmatpush1.msra.mxu0 0.0
      %451 = vmatprep.subr.mxu0 0.0
      %452 = vmatpush1.msra.mxu0 0.0
      %453 = vmatprep.subr.mxu0 0.0
      %454 = vmatpush1.msra.mxu0 0.0
      %455 = vmatprep.subr.mxu0 0.0
      %456 = vmatpush1.msra.mxu0 0.0
      %457 = vmatprep.subr.mxu0 0.0
      %458 = vmatpush1.msra.mxu0 0.0
      %459 = vmatprep.subr.mxu0 0.0
      %460 = vmatpush1.msra.mxu0 0.0
      %461 = vmatprep.subr.mxu0 0.0
      %462 = vmatpush1.msra.mxu0 0.0
      %463 = vmatprep.subr.mxu0 0.0
      %464 = vmatpush1.msra.mxu0 0.0
      %465 = vmatprep.subr.mxu0 0.0
      %466 = vmatpush1.msra.mxu0 0.0
      %467 = vmatprep.subr.mxu0 0.0
      %468 = vmatpush1.msra.mxu0 0.0
      %469 = vmatprep.subr.mxu0 0.0
      %470 = vmatpush1.msra.mxu0 0.0
      %471 = vmatprep.subr.mxu0 0.0
      %472 = vmatpush1.msra.mxu0 0.0
      %473 = vmatprep.mubr.f32.mxu0 0.0
      %474 = vmatmul.mubr.f32.gmra.mrb[0].mxu0 %v377
      %v475 = vpop.f32.mrb[0].mxu0
      %v476 = vadd.f32 0.0, %v475
      %v477 = vpop.f32.mrb[0].mxu0
      %478 = vmatprep.mubr.f32.mxu0 0.0
      %479 = vmatmul.mubr.f32.gmra.mrb[0].mxu0 %v378
      %v480 = vpop.f32.mrb[0].mxu0
      %v481 = vadd.f32 0.0, %v480
      %v482 = vpop.f32.mrb[0].mxu0
      %483 = vmatprep.mubr.f32.mxu0 0.0
      %484 = vmatmul.mubr.f32.gmra.mrb[0].mxu0 %v379
      %v485 = vpop.f32.mrb[0].mxu0
      %v486 = vadd.f32 0.0, %v485
      %v487 = vpop.f32.mrb[0].mxu0
      %488 = vmatprep.mubr.f32.mxu0 0.0
      %489 = vmatmul.mubr.f32.gmra.mrb[0].mxu0 %v380
      %v490 = vpop.f32.mrb[0].mxu0
      %v491 = vadd.f32 0.0, %v490
      %v492 = vpop.f32.mrb[0].mxu0
      %493 = vmatprep.mubr.f32.mxu0 0.0
      %494 = vmatmul.mubr.f32.gmra.mrb[0].mxu0 %v381
      %v495 = vpop.f32.mrb[0].mxu0
      %v496 = vadd.f32 0.0, %v495
      %v497 = vpop.f32.mrb[0].mxu0
      %498 = vmatprep.mubr.f32.mxu0 0.0
      %499 = vmatmul.mubr.f32.gmra.mrb[0].mxu0 %v382
      %v500 = vpop.f32.mrb[0].mxu0
      %v501 = vadd.f32 0.0, %v500
      %v502 = vpop.f32.mrb[0].mxu0
      %503 = vmatprep.mubr.f32.mxu0 0.0
      %504 = vmatmul.mubr.f32.gmra.mrb[0].mxu0 %v383
      %v505 = vpop.f32.mrb[0].mxu0
      %v506 = vadd.f32 0.0, %v505
      %v507 = vpop.f32.mrb[0].mxu0
      %508 = vmatprep.mubr.f32.mxu0 0.0
      %509 = vmatmul.mubr.f32.gmra.mrb[0].mxu0 %v384
      %v510 = vpop.f32.mrb[0].mxu0
      %v511 = vadd.f32 0.0, %v510
      %v512 = vpop.f32.mrb[0].mxu0
      %513 = vmatprep.mubr.f32.mxu0 0.0
      %514 = vmatmul.mubr.f32.gmra.mrb[0].mxu0 %v385
      %v515 = vpop.f32.mrb[0].mxu0
      %v516 = vadd.f32 0.0, %v515
      %v517 = vpop.f32.mrb[0].mxu0
      %518 = vmatprep.mubr.f32.mxu0 0.0
      %519 = vmatmul.mubr.f32.gmra.mrb[0].mxu0 %v386
      %v520 = vpop.f32.mrb[0].mxu0
      %v521 = vadd.f32 0.0, %v520
      %v522 = vpop.f32.mrb[0].mxu0
      %523 = vmatprep.mubr.f32.mxu0 0.0
      %524 = vmatmul.mubr.f32.gmra.mrb[0].mxu0 %v387
      %v525 = vpop.f32.mrb[0].mxu0
      %v526 = vadd.f32 0.0, %v525
      %v527 = vpop.f32.mrb[0].mxu0
      %528 = vmatprep.mubr.f32.mxu0 0.0
      %529 = vmatmul.mubr.f32.gmra.mrb[0].mxu0 %v388
      %v530 = vpop.f32.mrb[0].mxu0
      %v531 = vadd.f32 0.0, %v530
      %v532 = vpop.f32.mrb[0].mxu0
      %533 = vmatprep.mubr.f32.mxu0 0.0
      %534 = vmatmul.mubr.f32.gmra.mrb[0].mxu0 %v389
      %v535 = vpop.f32.mrb[0].mxu0
      %v536 = vadd.f32 0.0, %v535
      %v537 = vpop.f32.mrb[0].mxu0
      %538 = vmatprep.mubr.f32.mxu0 0.0
      %539 = vmatmul.mubr.f32.gmra.mrb[0].mxu0 %v390
      %v540 = vpop.f32.mrb[0].mxu0
      %v541 = vadd.f32 0.0, %v540
      %v542 = vpop.f32.mrb[0].mxu0
      %543 = vmatprep.mubr.f32.mxu0 0.0
      %544 = vmatmul.mubr.f32.gmra.mrb[0].mxu0 %v391
      %v545 = vpop.f32.mrb[0].mxu0
      %v546 = vadd.f32 0.0, %v545
      %v547 = vpop.f32.mrb[0].mxu0
      %548 = vmatprep.mubr.f32.mxu0 0.0
      %549 = vmatmul.mubr.f32.gmra.mrb[0].mxu0 %v392
      %v550 = vpop.f32.mrb[0].mxu0
      %v551 = vadd.f32 0.0, %v550
      %v552 = vpop.f32.mrb[0].mxu0
      %553 = vdwg.mxu0
      %v554 = vld [vmem:[%s2] sm:$0xff]
      %v555 = vld [vmem:[%s2 + $0x8] sm:$0xff]
      %v556 = vld [vmem:[%s2 + $0x10] sm:$0xff]
      %v557 = vld [vmem:[%s2 + $0x18] sm:$0xff]
      %vm558 = vcmask 261120
      %v560 = vsel %vm558, 0.0, 0
      %562 = vmatprep.subr.mxu0 0.0
      %563 = vmatpush1.msra.mxu0 %v554
      %564 = vmatprep.subr.mxu0 0.0
      %565 = vmatpush1.msra.mxu0 %v555
      %566 = vmatprep.subr.mxu0 0.0
      %567 = vmatpush1.msra.mxu0 %v556
      %568 = vmatprep.subr.mxu0 0.0
      %569 = vmatpush1.msra.mxu0 %v557
      %570 = vmatprep.subr.mxu0 0.0
      %571 = vmatpush1.msra.mxu0 0.0
      %572 = vmatprep.subr.mxu0 0.0
      %573 = vmatpush1.msra.mxu0 0.0
      %574 = vmatprep.subr.mxu0 0.0
      %575 = vmatpush1.msra.mxu0 0.0
      %576 = vmatprep.subr.mxu0 0.0
      %577 = vmatpush1.msra.mxu0 0.0
      %578 = vmatprep.subr.mxu0 0.0
      %579 = vmatpush1.msra.mxu0 0.0
      %580 = vmatprep.subr.mxu0 0.0
      %581 = vmatpush1.msra.mxu0 0.0
      %582 = vmatprep.subr.mxu0 0.0
      %583 = vmatpush1.msra.mxu0 0.0
      %584 = vmatprep.subr.mxu0 0.0
      %585 = vmatpush1.msra.mxu0 0.0
      %586 = vmatprep.subr.mxu0 0.0
      %587 = vmatpush1.msra.mxu0 0.0
      %588 = vmatprep.subr.mxu0 0.0
      %589 = vmatpush1.msra.mxu0 0.0
      %590 = vmatprep.subr.mxu0 0.0
      %591 = vmatpush1.msra.mxu0 0.0
      %592 = vmatprep.subr.mxu0 0.0
      %593 = vmatpush1.msra.mxu0 0.0
      %594 = vmatprep.subr.mxu0 0.0
      %595 = vmatpush1.msra.mxu0 0.0
      %596 = vmatprep.subr.mxu0 0.0
      %597 = vmatpush1.msra.mxu0 0.0
      %598 = vmatprep.subr.mxu0 0.0
      %599 = vmatpush1.msra.mxu0 0.0
      %600 = vmatprep.subr.mxu0 0.0
      %601 = vmatpush1.msra.mxu0 0.0
      %602 = vmatprep.subr.mxu0 0.0
      %603 = vmatpush1.msra.mxu0 0.0
      %604 = vmatprep.subr.mxu0 0.0
      %605 = vmatpush1.msra.mxu0 0.0
      %606 = vmatprep.subr.mxu0 0.0
      %607 = vmatpush1.msra.mxu0 0.0
      %608 = vmatprep.subr.mxu0 0.0
      %609 = vmatpush1.msra.mxu0 0.0
      %610 = vmatprep.subr.mxu0 0.0
      %611 = vmatpush1.msra.mxu0 0.0
      %612 = vmatprep.subr.mxu0 0.0
      %613 = vmatpush1.msra.mxu0 0.0
      %614 = vmatprep.subr.mxu0 0.0
      %615 = vmatpush1.msra.mxu0 0.0
      %616 = vmatprep.subr.mxu0 0.0
      %617 = vmatpush1.msra.mxu0 0.0
      %618 = vmatprep.subr.mxu0 0.0
      %619 = vmatpush1.msra.mxu0 0.0
      %620 = vmatprep.subr.mxu0 0.0
      %621 = vmatpush1.msra.mxu0 0.0
      %622 = vmatprep.subr.mxu0 0.0
      %623 = vmatpush1.msra.mxu0 0.0
      %624 = vmatprep.subr.mxu0 0.0
      %625 = vmatpush1.msra.mxu0 0.0
      %626 = vmatprep.mubr.f32.mxu0 0.0
      %627 = vmatmul.mubr.f32.gmra.mrb[0].mxu0 %v560
      %v628 = vpop.f32.mrb[0].mxu0
      %v629 = vadd.f32 0.0, %v628
      %v630 = vpop.f32.mrb[0].mxu0
      %631 = vmatprep.mubr.f32.mxu0 0.0
      %632 = vmatmul.mubr.f32.gmra.mrb[0].mxu0 %v560
      %v633 = vpop.f32.mrb[0].mxu0
      %v634 = vadd.f32 0.0, %v633
      %v635 = vpop.f32.mrb[0].mxu0
      %636 = vdwg.mxu0
      %v637 = vadd.f32 %v476, %v629
      %v638 = vadd.f32 %v481, %v634
      %v639 = vtanh.pop %v637
      %v640 = vtanh.pop %v638
      %v642 = vsel %vm558, %v639, 0
      %v645 = vsel %vm558, %v640, 0
      %647 = vmatprep.subr.mxu0 0.0
      %648 = vmatpush1.msra.mxu0 %v554
      %649 = vmatprep.subr.mxu0 0.0
      %650 = vmatpush1.msra.mxu0 %v555
      %651 = vmatprep.subr.mxu0 0.0
      %652 = vmatpush1.msra.mxu0 %v556
      %653 = vmatprep.subr.mxu0 0.0
      %654 = vmatpush1.msra.mxu0 %v557
      %655 = vmatprep.subr.mxu0 0.0
      %656 = vmatpush1.msra.mxu0 0.0
      %657 = vmatprep.subr.mxu0 0.0
      %658 = vmatpush1.msra.mxu0 0.0
      %659 = vmatprep.subr.mxu0 0.0
      %660 = vmatpush1.msra.mxu0 0.0
      %661 = vmatprep.subr.mxu0 0.0
      %662 = vmatpush1.msra.mxu0 0.0
      %663 = vmatprep.subr.mxu0 0.0
      %664 = vmatpush1.msra.mxu0 0.0
      %665 = vmatprep.subr.mxu0 0.0
      %666 = vmatpush1.msra.mxu0 0.0
      %667 = vmatprep.subr.mxu0 0.0
      %668 = vmatpush1.msra.mxu0 0.0
      %669 = vmatprep.subr.mxu0 0.0
      %670 = vmatpush1.msra.mxu0 0.0
      %671 = vmatprep.subr.mxu0 0.0
      %672 = vmatpush1.msra.mxu0 0.0
      %673 = vmatprep.subr.mxu0 0.0
      %674 = vmatpush1.msra.mxu0 0.0
      %675 = vmatprep.subr.mxu0 0.0
      %676 = vmatpush1.msra.mxu0 0.0
      %677 = vmatprep.subr.mxu0 0.0
      %678 = vmatpush1.msra.mxu0 0.0
      %679 = vmatprep.subr.mxu0 0.0
      %680 = vmatpush1.msra.mxu0 0.0
      %681 = vmatprep.subr.mxu0 0.0
      %682 = vmatpush1.msra.mxu0 0.0
      %683 = vmatprep.subr.mxu0 0.0
      %684 = vmatpush1.msra.mxu0 0.0
      %685 = vmatprep.subr.mxu0 0.0
      %686 = vmatpush1.msra.mxu0 0.0
      %687 = vmatprep.subr.mxu0 0.0
      %688 = vmatpush1.msra.mxu0 0.0
      %689 = vmatprep.subr.mxu0 0.0
      %690 = vmatpush1.msra.mxu0 0.0
      %691 = vmatprep.subr.mxu0 0.0
      %692 = vmatpush1.msra.mxu0 0.0
      %693 = vmatprep.subr.mxu0 0.0
      %694 = vmatpush1.msra.mxu0 0.0
      %695 = vmatprep.subr.mxu0 0.0
      %696 = vmatpush1.msra.mxu0 0.0
      %697 = vmatprep.subr.mxu0 0.0
      %698 = vmatpush1.msra.mxu0 0.0
      %699 = vmatprep.subr.mxu0 0.0
      %700 = vmatpush1.msra.mxu0 0.0
      %701 = vmatprep.subr.mxu0 0.0
      %702 = vmatpush1.msra.mxu0 0.0
      %703 = vmatprep.subr.mxu0 0.0
      %704 = vmatpush1.msra.mxu0 0.0
      %705 = vmatprep.subr.mxu0 0.0
      %706 = vmatpush1.msra.mxu0 0.0
      %707 = vmatprep.subr.mxu0 0.0
      %708 = vmatpush1.msra.mxu0 0.0
      %709 = vmatprep.subr.mxu0 0.0
      %710 = vmatpush1.msra.mxu0 0.0
      %711 = vmatprep.mubr.f32.mxu0 0.0
      %712 = vmatmul.mubr.f32.gmra.mrb[0].mxu0 %v642
      %v713 = vpop.f32.mrb[0].mxu0
      %v714 = vadd.f32 0.0, %v713
      %v715 = vpop.f32.mrb[0].mxu0
      %716 = vmatprep.mubr.f32.mxu0 0.0
      %717 = vmatmul.mubr.f32.gmra.mrb[0].mxu0 %v645
      %v718 = vpop.f32.mrb[0].mxu0
      %v719 = vadd.f32 0.0, %v718
      %v720 = vpop.f32.mrb[0].mxu0
      %721 = vdwg.mxu0
      %v722 = vadd.f32 %v486, %v714
      %v723 = vadd.f32 %v491, %v719
      %v724 = vtanh.pop %v722
      %v725 = vtanh.pop %v723
      %v727 = vsel %vm558, %v724, 0
      %v730 = vsel %vm558, %v725, 0
      %732 = vmatprep.subr.mxu0 0.0
      %733 = vmatpush1.msra.mxu0 %v554
      %734 = vmatprep.subr.mxu0 0.0
      %735 = vmatpush1.msra.mxu0 %v555
      %736 = vmatprep.subr.mxu0 0.0
      %737 = vmatpush1.msra.mxu0 %v556
      %738 = vmatprep.subr.mxu0 0.0
      %739 = vmatpush1.msra.mxu0 %v557
      %740 = vmatprep.subr.mxu0 0.0
      %741 = vmatpush1.msra.mxu0 0.0
      %742 = vmatprep.subr.mxu0 0.0
      %743 = vmatpush1.msra.mxu0 0.0
      %744 = vmatprep.subr.mxu0 0.0
      %745 = vmatpush1.msra.mxu0 0.0
      %746 = vmatprep.subr.mxu0 0.0
      %747 = vmatpush1.msra.mxu0 0.0
      %748 = vmatprep.subr.mxu0 0.0
      %749 = vmatpush1.msra.mxu0 0.0
      %750 = vmatprep.subr.mxu0 0.0
      %751 = vmatpush1.msra.mxu0 0.0
      %752 = vmatprep.subr.mxu0 0.0
      %753 = vmatpush1.msra.mxu0 0.0
      %754 = vmatprep.subr.mxu0 0.0
      %755 = vmatpush1.msra.mxu0 0.0
      %756 = vmatprep.subr.mxu0 0.0
      %757 = vmatpush1.msra.mxu0 0.0
      %758 = vmatprep.subr.mxu0 0.0
      %759 = vmatpush1.msra.mxu0 0.0
      %760 = vmatprep.subr.mxu0 0.0
      %761 = vmatpush1.msra.mxu0 0.0
      %762 = vmatprep.subr.mxu0 0.0
      %763 = vmatpush1.msra.mxu0 0.0
      %764 = vmatprep.subr.mxu0 0.0
      %765 = vmatpush1.msra.mxu0 0.0
      %766 = vmatprep.subr.mxu0 0.0
      %767 = vmatpush1.msra.mxu0 0.0
      %768 = vmatprep.subr.mxu0 0.0
      %769 = vmatpush1.msra.mxu0 0.0
      %770 = vmatprep.subr.mxu0 0.0
      %771 = vmatpush1.msra.mxu0 0.0
      %772 = vmatprep.subr.mxu0 0.0
      %773 = vmatpush1.msra.mxu0 0.0
      %774 = vmatprep.subr.mxu0 0.0
      %775 = vmatpush1.msra.mxu0 0.0
      %776 = vmatprep.subr.mxu0 0.0
      %777 = vmatpush1.msra.mxu0 0.0
      %778 = vmatprep.subr.mxu0 0.0
      %779 = vmatpush1.msra.mxu0 0.0
      %780 = vmatprep.subr.mxu0 0.0
      %781 = vmatpush1.msra.mxu0 0.0
      %782 = vmatprep.subr.mxu0 0.0
      %783 = vmatpush1.msra.mxu0 0.0
      %784 = vmatprep.subr.mxu0 0.0
      %785 = vmatpush1.msra.mxu0 0.0
      %786 = vmatprep.subr.mxu0 0.0
      %787 = vmatpush1.msra.mxu0 0.0
      %788 = vmatprep.subr.mxu0 0.0
      %789 = vmatpush1.msra.mxu0 0.0
      %790 = vmatprep.subr.mxu0 0.0
      %791 = vmatpush1.msra.mxu0 0.0
      %792 = vmatprep.subr.mxu0 0.0
      %793 = vmatpush1.msra.mxu0 0.0
      %794 = vmatprep.subr.mxu0 0.0
      %795 = vmatpush1.msra.mxu0 0.0
      %796 = vmatprep.mubr.f32.mxu0 0.0
      %797 = vmatmul.mubr.f32.gmra.mrb[0].mxu0 %v727
      %v798 = vpop.f32.mrb[0].mxu0
      %v799 = vadd.f32 0.0, %v798
      %v800 = vpop.f32.mrb[0].mxu0
      %801 = vmatprep.mubr.f32.mxu0 0.0
      %802 = vmatmul.mubr.f32.gmra.mrb[0].mxu0 %v730
      %v803 = vpop.f32.mrb[0].mxu0
      %v804 = vadd.f32 0.0, %v803
      %v805 = vpop.f32.mrb[0].mxu0
      %806 = vdwg.mxu0
      %v807 = vadd.f32 %v496, %v799
      %v808 = vadd.f32 %v501, %v804
      %v809 = vtanh.pop %v807
      %v810 = vtanh.pop %v808
      %v812 = vsel %vm558, %v809, 0
      %v815 = vsel %vm558, %v810, 0
      %817 = vmatprep.subr.mxu0 0.0
      %818 = vmatpush1.msra.mxu0 %v554
      %819 = vmatprep.subr.mxu0 0.0
      %820 = vmatpush1.msra.mxu0 %v555
      %821 = vmatprep.subr.mxu0 0.0
      %822 = vmatpush1.msra.mxu0 %v556
      %823 = vmatprep.subr.mxu0 0.0
      %824 = vmatpush1.msra.mxu0 %v557
      %825 = vmatprep.subr.mxu0 0.0
      %826 = vmatpush1.msra.mxu0 0.0
      %827 = vmatprep.subr.mxu0 0.0
      %828 = vmatpush1.msra.mxu0 0.0
      %829 = vmatprep.subr.mxu0 0.0
      %830 = vmatpush1.msra.mxu0 0.0
      %831 = vmatprep.subr.mxu0 0.0
      %832 = vmatpush1.msra.mxu0 0.0
      %833 = vmatprep.subr.mxu0 0.0
      %834 = vmatpush1.msra.mxu0 0.0
      %835 = vmatprep.subr.mxu0 0.0
      %836 = vmatpush1.msra.mxu0 0.0
      %837 = vmatprep.subr.mxu0 0.0
      %838 = vmatpush1.msra.mxu0 0.0
      %839 = vmatprep.subr.mxu0 0.0
      %840 = vmatpush1.msra.mxu0 0.0
      %841 = vmatprep.subr.mxu0 0.0
      %842 = vmatpush1.msra.mxu0 0.0
      %843 = vmatprep.subr.mxu0 0.0
      %844 = vmatpush1.msra.mxu0 0.0
      %845 = vmatprep.subr.mxu0 0.0
      %846 = vmatpush1.msra.mxu0 0.0
      %847 = vmatprep.subr.mxu0 0.0
      %848 = vmatpush1.msra.mxu0 0.0
      %849 = vmatprep.subr.mxu0 0.0
      %850 = vmatpush1.msra.mxu0 0.0
      %851 = vmatprep.subr.mxu0 0.0
      %852 = vmatpush1.msra.mxu0 0.0
      %853 = vmatprep.subr.mxu0 0.0
      %854 = vmatpush1.msra.mxu0 0.0
      %855 = vmatprep.subr.mxu0 0.0
      %856 = vmatpush1.msra.mxu0 0.0
      %857 = vmatprep.subr.mxu0 0.0
      %858 = vmatpush1.msra.mxu0 0.0
      %859 = vmatprep.subr.mxu0 0.0
      %860 = vmatpush1.msra.mxu0 0.0
      %861 = vmatprep.subr.mxu0 0.0
      %862 = vmatpush1.msra.mxu0 0.0
      %863 = vmatprep.subr.mxu0 0.0
      %864 = vmatpush1.msra.mxu0 0.0
      %865 = vmatprep.subr.mxu0 0.0
      %866 = vmatpush1.msra.mxu0 0.0
      %867 = vmatprep.subr.mxu0 0.0
      %868 = vmatpush1.msra.mxu0 0.0
      %869 = vmatprep.subr.mxu0 0.0
      %870 = vmatpush1.msra.mxu0 0.0
      %871 = vmatprep.subr.mxu0 0.0
      %872 = vmatpush1.msra.mxu0 0.0
      %873 = vmatprep.subr.mxu0 0.0
      %874 = vmatpush1.msra.mxu0 0.0
      %875 = vmatprep.subr.mxu0 0.0
      %876 = vmatpush1.msra.mxu0 0.0
      %877 = vmatprep.subr.mxu0 0.0
      %878 = vmatpush1.msra.mxu0 0.0
      %879 = vmatprep.subr.mxu0 0.0
      %880 = vmatpush1.msra.mxu0 0.0
      %881 = vmatprep.mubr.f32.mxu0 0.0
      %882 = vmatmul.mubr.f32.gmra.mrb[0].mxu0 %v812
      %v883 = vpop.f32.mrb[0].mxu0
      %v884 = vadd.f32 0.0, %v883
      %v885 = vpop.f32.mrb[0].mxu0
      %886 = vmatprep.mubr.f32.mxu0 0.0
      %887 = vmatmul.mubr.f32.gmra.mrb[0].mxu0 %v815
      %v888 = vpop.f32.mrb[0].mxu0
      %v889 = vadd.f32 0.0, %v888
      %v890 = vpop.f32.mrb[0].mxu0
      %891 = vdwg.mxu0
      %v892 = vadd.f32 %v506, %v884
      %v893 = vadd.f32 %v511, %v889
      %v894 = vtanh.pop %v892
      %v895 = vtanh.pop %v893
      %v897 = vsel %vm558, %v894, 0
      %v900 = vsel %vm558, %v895, 0
      %902 = vmatprep.subr.mxu0 0.0
      %903 = vmatpush1.msra.mxu0 %v554
      %904 = vmatprep.subr.mxu0 0.0
      %905 = vmatpush1.msra.mxu0 %v555
      %906 = vmatprep.subr.mxu0 0.0
      %907 = vmatpush1.msra.mxu0 %v556
      %908 = vmatprep.subr.mxu0 0.0
      %909 = vmatpush1.msra.mxu0 %v557
      %910 = vmatprep.subr.mxu0 0.0
      %911 = vmatpush1.msra.mxu0 0.0
      %912 = vmatprep.subr.mxu0 0.0
      %913 = vmatpush1.msra.mxu0 0.0
      %914 = vmatprep.subr.mxu0 0.0
      %915 = vmatpush1.msra.mxu0 0.0
      %916 = vmatprep.subr.mxu0 0.0
      %917 = vmatpush1.msra.mxu0 0.0
      %918 = vmatprep.subr.mxu0 0.0
      %919 = vmatpush1.msra.mxu0 0.0
      %920 = vmatprep.subr.mxu0 0.0
      %921 = vmatpush1.msra.mxu0 0.0
      %922 = vmatprep.subr.mxu0 0.0
      %923 = vmatpush1.msra.mxu0 0.0
      %924 = vmatprep.subr.mxu0 0.0
      %925 = vmatpush1.msra.mxu0 0.0
      %926 = vmatprep.subr.mxu0 0.0
      %927 = vmatpush1.msra.mxu0 0.0
      %928 = vmatprep.subr.mxu0 0.0
      %929 = vmatpush1.msra.mxu0 0.0
      %930 = vmatprep.subr.mxu0 0.0
      %931 = vmatpush1.msra.mxu0 0.0
      %932 = vmatprep.subr.mxu0 0.0
      %933 = vmatpush1.msra.mxu0 0.0
      %934 = vmatprep.subr.mxu0 0.0
      %935 = vmatpush1.msra.mxu0 0.0
      %936 = vmatprep.subr.mxu0 0.0
      %937 = vmatpush1.msra.mxu0 0.0
      %938 = vmatprep.subr.mxu0 0.0
      %939 = vmatpush1.msra.mxu0 0.0
      %940 = vmatprep.subr.mxu0 0.0
      %941 = vmatpush1.msra.mxu0 0.0
      %942 = vmatprep.subr.mxu0 0.0
      %943 = vmatpush1.msra.mxu0 0.0
      %944 = vmatprep.subr.mxu0 0.0
      %945 = vmatpush1.msra.mxu0 0.0
      %946 = vmatprep.subr.mxu0 0.0
      %947 = vmatpush1.msra.mxu0 0.0
      %948 = vmatprep.subr.mxu0 0.0
      %949 = vmatpush1.msra.mxu0 0.0
      %950 = vmatprep.subr.mxu0 0.0
      %951 = vmatpush1.msra.mxu0 0.0
      %952 = vmatprep.subr.mxu0 0.0
      %953 = vmatpush1.msra.mxu0 0.0
      %954 = vmatprep.subr.mxu0 0.0
      %955 = vmatpush1.msra.mxu0 0.0
      %956 = vmatprep.subr.mxu0 0.0
      %957 = vmatpush1.msra.mxu0 0.0
      %958 = vmatprep.subr.mxu0 0.0
      %959 = vmatpush1.msra.mxu0 0.0
      %960 = vmatprep.subr.mxu0 0.0
      %961 = vmatpush1.msra.mxu0 0.0
      %962 = vmatprep.subr.mxu0 0.0
      %963 = vmatpush1.msra.mxu0 0.0
      %964 = vmatprep.subr.mxu0 0.0
      %965 = vmatpush1.msra.mxu0 0.0
      %966 = vmatprep.mubr.f32.mxu0 0.0
      %967 = vmatmul.mubr.f32.gmra.mrb[0].mxu0 %v897
      %v968 = vpop.f32.mrb[0].mxu0
      %v969 = vadd.f32 0.0, %v968
      %v970 = vpop.f32.mrb[0].mxu0
      %971 = vmatprep.mubr.f32.mxu0 0.0
      %972 = vmatmul.mubr.f32.gmra.mrb[0].mxu0 %v900
      %v973 = vpop.f32.mrb[0].mxu0
      %v974 = vadd.f32 0.0, %v973
      %v975 = vpop.f32.mrb[0].mxu0
      %976 = vdwg.mxu0
      %v977 = vadd.f32 %v516, %v969
      %v978 = vadd.f32 %v521, %v974
      %v979 = vtanh.pop %v977
      %v980 = vtanh.pop %v978
      %v982 = vsel %vm558, %v979, 0
      %v985 = vsel %vm558, %v980, 0
      %987 = vmatprep.subr.mxu0 0.0
      %988 = vmatpush1.msra.mxu0 %v554
      %989 = vmatprep.subr.mxu0 0.0
      %990 = vmatpush1.msra.mxu0 %v555
      %991 = vmatprep.subr.mxu0 0.0
      %992 = vmatpush1.msra.mxu0 %v556
      %993 = vmatprep.subr.mxu0 0.0
      %994 = vmatpush1.msra.mxu0 %v557
      %995 = vmatprep.subr.mxu0 0.0
      %996 = vmatpush1.msra.mxu0 0.0
      %997 = vmatprep.subr.mxu0 0.0
      %998 = vmatpush1.msra.mxu0 0.0
      %999 = vmatprep.subr.mxu0 0.0
      %1000 = vmatpush1.msra.mxu0 0.0
      %1001 = vmatprep.subr.mxu0 0.0
      %1002 = vmatpush1.msra.mxu0 0.0
      %1003 = vmatprep.subr.mxu0 0.0
      %1004 = vmatpush1.msra.mxu0 0.0
      %1005 = vmatprep.subr.mxu0 0.0
      %1006 = vmatpush1.msra.mxu0 0.0
      %1007 = vmatprep.subr.mxu0 0.0
      %1008 = vmatpush1.msra.mxu0 0.0
      %1009 = vmatprep.subr.mxu0 0.0
      %1010 = vmatpush1.msra.mxu0 0.0
      %1011 = vmatprep.subr.mxu0 0.0
      %1012 = vmatpush1.msra.mxu0 0.0
      %1013 = vmatprep.subr.mxu0 0.0
      %1014 = vmatpush1.msra.mxu0 0.0
      %1015 = vmatprep.subr.mxu0 0.0
      %1016 = vmatpush1.msra.mxu0 0.0
      %1017 = vmatprep.subr.mxu0 0.0
      %1018 = vmatpush1.msra.mxu0 0.0
      %1019 = vmatprep.subr.mxu0 0.0
      %1020 = vmatpush1.msra.mxu0 0.0
      %1021 = vmatprep.subr.mxu0 0.0
      %1022 = vmatpush1.msra.mxu0 0.0
      %1023 = vmatprep.subr.mxu0 0.0
      %1024 = vmatpush1.msra.mxu0 0.0
      %1025 = vmatprep.subr.mxu0 0.0
      %1026 = vmatpush1.msra.mxu0 0.0
      %1027 = vmatprep.subr.mxu0 0.0
      %1028 = vmatpush1.msra.mxu0 0.0
      %1029 = vmatprep.subr.mxu0 0.0
      %1030 = vmatpush1.msra.mxu0 0.0
      %1031 = vmatprep.subr.mxu0 0.0
      %1032 = vmatpush1.msra.mxu0 0.0
      %1033 = vmatprep.subr.mxu0 0.0
      %1034 = vmatpush1.msra.mxu0 0.0
      %1035 = vmatprep.subr.mxu0 0.0
      %1036 = vmatpush1.msra.mxu0 0.0
      %1037 = vmatprep.subr.mxu0 0.0
      %1038 = vmatpush1.msra.mxu0 0.0
      %1039 = vmatprep.subr.mxu0 0.0
      %1040 = vmatpush1.msra.mxu0 0.0
      %1041 = vmatprep.subr.mxu0 0.0
      %1042 = vmatpush1.msra.mxu0 0.0
      %1043 = vmatprep.subr.mxu0 0.0
      %1044 = vmatpush1.msra.mxu0 0.0
      %1045 = vmatprep.subr.mxu0 0.0
      %1046 = vmatpush1.msra.mxu0 0.0
      %1047 = vmatprep.subr.mxu0 0.0
      %1048 = vmatpush1.msra.mxu0 0.0
      %1049 = vmatprep.subr.mxu0 0.0
      %1050 = vmatpush1.msra.mxu0 0.0
      %1051 = vmatprep.mubr.f32.mxu0 0.0
      %1052 = vmatmul.mubr.f32.gmra.mrb[0].mxu0 %v982
      %v1053 = vpop.f32.mrb[0].mxu0
      %v1054 = vadd.f32 0.0, %v1053
      %v1055 = vpop.f32.mrb[0].mxu0
      %1056 = vmatprep.mubr.f32.mxu0 0.0
      %1057 = vmatmul.mubr.f32.gmra.mrb[0].mxu0 %v985
      %v1058 = vpop.f32.mrb[0].mxu0
      %v1059 = vadd.f32 0.0, %v1058
      %v1060 = vpop.f32.mrb[0].mxu0
      %1061 = vdwg.mxu0
      %v1062 = vadd.f32 %v526, %v1054
      %v1063 = vadd.f32 %v531, %v1059
      %v1064 = vtanh.pop %v1062
      %v1065 = vtanh.pop %v1063
      %v1067 = vsel %vm558, %v1064, 0
      %v1070 = vsel %vm558, %v1065, 0
      %1072 = vmatprep.subr.mxu0 0.0
      %1073 = vmatpush1.msra.mxu0 %v554
      %1074 = vmatprep.subr.mxu0 0.0
      %1075 = vmatpush1.msra.mxu0 %v555
      %1076 = vmatprep.subr.mxu0 0.0
      %1077 = vmatpush1.msra.mxu0 %v556
      %1078 = vmatprep.subr.mxu0 0.0
      %1079 = vmatpush1.msra.mxu0 %v557
      %1080 = vmatprep.subr.mxu0 0.0
      %1081 = vmatpush1.msra.mxu0 0.0
      %1082 = vmatprep.subr.mxu0 0.0
      %1083 = vmatpush1.msra.mxu0 0.0
      %1084 = vmatprep.subr.mxu0 0.0
      %1085 = vmatpush1.msra.mxu0 0.0
      %1086 = vmatprep.subr.mxu0 0.0
      %1087 = vmatpush1.msra.mxu0 0.0
      %1088 = vmatprep.subr.mxu0 0.0
      %1089 = vmatpush1.msra.mxu0 0.0
      %1090 = vmatprep.subr.mxu0 0.0
      %1091 = vmatpush1.msra.mxu0 0.0
      %1092 = vmatprep.subr.mxu0 0.0
      %1093 = vmatpush1.msra.mxu0 0.0
      %1094 = vmatprep.subr.mxu0 0.0
      %1095 = vmatpush1.msra.mxu0 0.0
      %1096 = vmatprep.subr.mxu0 0.0
      %1097 = vmatpush1.msra.mxu0 0.0
      %1098 = vmatprep.subr.mxu0 0.0
      %1099 = vmatpush1.msra.mxu0 0.0
      %1100 = vmatprep.subr.mxu0 0.0
      %1101 = vmatpush1.msra.mxu0 0.0
      %1102 = vmatprep.subr.mxu0 0.0
      %1103 = vmatpush1.msra.mxu0 0.0
      %1104 = vmatprep.subr.mxu0 0.0
      %1105 = vmatpush1.msra.mxu0 0.0
      %1106 = vmatprep.subr.mxu0 0.0
      %1107 = vmatpush1.msra.mxu0 0.0
      %1108 = vmatprep.subr.mxu0 0.0
      %1109 = vmatpush1.msra.mxu0 0.0
      %1110 = vmatprep.subr.mxu0 0.0
      %1111 = vmatpush1.msra.mxu0 0.0
      %1112 = vmatprep.subr.mxu0 0.0
      %1113 = vmatpush1.msra.mxu0 0.0
      %1114 = vmatprep.subr.mxu0 0.0
      %1115 = vmatpush1.msra.mxu0 0.0
      %1116 = vmatprep.subr.mxu0 0.0
      %1117 = vmatpush1.msra.mxu0 0.0
      %1118 = vmatprep.subr.mxu0 0.0
      %1119 = vmatpush1.msra.mxu0 0.0
      %1120 = vmatprep.subr.mxu0 0.0
      %1121 = vmatpush1.msra.mxu0 0.0
      %1122 = vmatprep.subr.mxu0 0.0
      %1123 = vmatpush1.msra.mxu0 0.0
      %1124 = vmatprep.subr.mxu0 0.0
      %1125 = vmatpush1.msra.mxu0 0.0
      %1126 = vmatprep.subr.mxu0 0.0
      %1127 = vmatpush1.msra.mxu0 0.0
      %1128 = vmatprep.subr.mxu0 0.0
      %1129 = vmatpush1.msra.mxu0 0.0
      %1130 = vmatprep.subr.mxu0 0.0
      %1131 = vmatpush1.msra.mxu0 0.0
      %1132 = vmatprep.subr.mxu0 0.0
      %1133 = vmatpush1.msra.mxu0 0.0
      %1134 = vmatprep.subr.mxu0 0.0
      %1135 = vmatpush1.msra.mxu0 0.0
      %1136 = vmatprep.mubr.f32.mxu0 0.0
      %1137 = vmatmul.mubr.f32.gmra.mrb[0].mxu0 %v1067
      %v1138 = vpop.f32.mrb[0].mxu0
      %v1139 = vadd.f32 0.0, %v1138
      %v1140 = vpop.f32.mrb[0].mxu0
      %1141 = vmatprep.mubr.f32.mxu0 0.0
      %1142 = vmatmul.mubr.f32.gmra.mrb[0].mxu0 %v1070
      %v1143 = vpop.f32.mrb[0].mxu0
      %v1144 = vadd.f32 0.0, %v1143
      %v1145 = vpop.f32.mrb[0].mxu0
      %1146 = vdwg.mxu0
      %v1147 = vadd.f32 %v536, %v1139
      %v1148 = vadd.f32 %v541, %v1144
      %v1149 = vtanh.pop %v1147
      %v1150 = vtanh.pop %v1148
      %v1152 = vsel %vm558, %v1149, 0
      %v1155 = vsel %vm558, %v1150, 0
      %1157 = vmatprep.subr.mxu0 0.0
      %1158 = vmatpush1.msra.mxu0 %v554
      %1159 = vmatprep.subr.mxu0 0.0
      %1160 = vmatpush1.msra.mxu0 %v555
      %1161 = vmatprep.subr.mxu0 0.0
      %1162 = vmatpush1.msra.mxu0 %v556
      %1163 = vmatprep.subr.mxu0 0.0
      %1164 = vmatpush1.msra.mxu0 %v557
      %1165 = vmatprep.subr.mxu0 0.0
      %1166 = vmatpush1.msra.mxu0 0.0
      %1167 = vmatprep.subr.mxu0 0.0
      %1168 = vmatpush1.msra.mxu0 0.0
      %1169 = vmatprep.subr.mxu0 0.0
      %1170 = vmatpush1.msra.mxu0 0.0
      %1171 = vmatprep.subr.mxu0 0.0
      %1172 = vmatpush1.msra.mxu0 0.0
      %1173 = vmatprep.subr.mxu0 0.0
      %1174 = vmatpush1.msra.mxu0 0.0
      %1175 = vmatprep.subr.mxu0 0.0
      %1176 = vmatpush1.msra.mxu0 0.0
      %1177 = vmatprep.subr.mxu0 0.0
      %1178 = vmatpush1.msra.mxu0 0.0
      %1179 = vmatprep.subr.mxu0 0.0
      %1180 = vmatpush1.msra.mxu0 0.0
      %1181 = vmatprep.subr.mxu0 0.0
      %1182 = vmatpush1.msra.mxu0 0.0
      %1183 = vmatprep.subr.mxu0 0.0
      %1184 = vmatpush1.msra.mxu0 0.0
      %1185 = vmatprep.subr.mxu0 0.0
      %1186 = vmatpush1.msra.mxu0 0.0
      %1187 = vmatprep.subr.mxu0 0.0
      %1188 = vmatpush1.msra.mxu0 0.0
      %1189 = vmatprep.subr.mxu0 0.0
      %1190 = vmatpush1.msra.mxu0 0.0
      %1191 = vmatprep.subr.mxu0 0.0
      %1192 = vmatpush1.msra.mxu0 0.0
      %1193 = vmatprep.subr.mxu0 0.0
      %1194 = vmatpush1.msra.mxu0 0.0
      %1195 = vmatprep.subr.mxu0 0.0
      %1196 = vmatpush1.msra.mxu0 0.0
      %1197 = vmatprep.subr.mxu0 0.0
      %1198 = vmatpush1.msra.mxu0 0.0
      %1199 = vmatprep.subr.mxu0 0.0
      %1200 = vmatpush1.msra.mxu0 0.0
      %1201 = vmatprep.subr.mxu0 0.0
      %1202 = vmatpush1.msra.mxu0 0.0
      %1203 = vmatprep.subr.mxu0 0.0
      %1204 = vmatpush1.msra.mxu0 0.0
      %1205 = vmatprep.subr.mxu0 0.0
      %1206 = vmatpush1.msra.mxu0 0.0
      %1207 = vmatprep.subr.mxu0 0.0
      %1208 = vmatpush1.msra.mxu0 0.0
      %1209 = vmatprep.subr.mxu0 0.0
      %1210 = vmatpush1.msra.mxu0 0.0
      %1211 = vmatprep.subr.mxu0 0.0
      %1212 = vmatpush1.msra.mxu0 0.0
      %1213 = vmatprep.subr.mxu0 0.0
      %1214 = vmatpush1.msra.mxu0 0.0
      %1215 = vmatprep.subr.mxu0 0.0
      %1216 = vmatpush1.msra.mxu0 0.0
      %1217 = vmatprep.subr.mxu0 0.0
      %1218 = vmatpush1.msra.mxu0 0.0
      %1219 = vmatprep.subr.mxu0 0.0
      %1220 = vmatpush1.msra.mxu0 0.0
      %1221 = vmatprep.mubr.f32.mxu0 0.0
      %1222 = vmatmul.mubr.f32.gmra.mrb[0].mxu0 %v1152
      %v1223 = vpop.f32.mrb[0].mxu0
      %v1224 = vadd.f32 0.0, %v1223
      %v1225 = vpop.f32.mrb[0].mxu0
      %1226 = vmatprep.mubr.f32.mxu0 0.0
      %1227 = vmatmul.mubr.f32.gmra.mrb[0].mxu0 %v1155
      %v1228 = vpop.f32.mrb[0].mxu0
      %v1229 = vadd.f32 0.0, %v1228
      %v1230 = vpop.f32.mrb[0].mxu0
      %1231 = vdwg.mxu0
      %v1232 = vadd.f32 %v546, %v1224
      %v1233 = vadd.f32 %v551, %v1229
      %v1234 = vtanh.pop %v1232
      %v1235 = vtanh.pop %v1233
      %1237 = vrot.lane.b32.xlu0 %v1235, 32
      %v1238 = vpop.permute.xlu0 %1237
      %v1240 = vsel %vm558, %v1234, %v1238
      %v1241 = vld [vmem:[%s3] sm:$0xff]
      %v1242 = vld [vmem:[%s3 + $0x8] sm:$0xff]
      %v1243 = vld [vmem:[%s3 + $0x10] sm:$0xff]
      %v1244 = vld [vmem:[%s3 + $0x18] sm:$0xff]
      %v1245 = vld [vmem:[%s3 + $0x20] sm:$0xff]
      %v1246 = vld [vmem:[%s3 + $0x28] sm:$0xff]
      %v1247 = vld [vmem:[%s3 + $0x30] sm:$0xff]
      %v1248 = vld [vmem:[%s3 + $0x38] sm:$0xff]
      %v1249 = vld [vmem:[%s4] sm:$0x1]
      %v1251 = vlaneseq
      %v1252 = vshrl.u32 %v1251, 7
      %v1253 = vsub.s32 0, %v1252
      %v1254 = vrot.slane %v1249, %v1253
      %vm1256 = vcmask 523264
      %v1258 = vsel %vm1256, %v1240, 0
      %1260 = vmatprep.subr.mxu0 0.0
      %1261 = vmatpush1.msra.mxu0 %v1241
      %1262 = vmatprep.subr.mxu0 0.0
      %1263 = vmatpush1.msra.mxu0 %v1242
      %1264 = vmatprep.subr.mxu0 0.0
      %1265 = vmatpush1.msra.mxu0 %v1243
      %1266 = vmatprep.subr.mxu0 0.0
      %1267 = vmatpush1.msra.mxu0 %v1244
      %1268 = vmatprep.subr.mxu0 0.0
      %1269 = vmatpush1.msra.mxu0 %v1245
      %1270 = vmatprep.subr.mxu0 0.0
      %1271 = vmatpush1.msra.mxu0 %v1246
      %1272 = vmatprep.subr.mxu0 0.0
      %1273 = vmatpush1.msra.mxu0 %v1247
      %1274 = vmatprep.subr.mxu0 0.0
      %1275 = vmatpush1.msra.mxu0 %v1248
      %1276 = vmatprep.subr.mxu0 0.0
      %1277 = vmatpush1.msra.mxu0 0.0
      %1278 = vmatprep.subr.mxu0 0.0
      %1279 = vmatpush1.msra.mxu0 0.0
      %1280 = vmatprep.subr.mxu0 0.0
      %1281 = vmatpush1.msra.mxu0 0.0
      %1282 = vmatprep.subr.mxu0 0.0
      %1283 = vmatpush1.msra.mxu0 0.0
      %1284 = vmatprep.subr.mxu0 0.0
      %1285 = vmatpush1.msra.mxu0 0.0
      %1286 = vmatprep.subr.mxu0 0.0
      %1287 = vmatpush1.msra.mxu0 0.0
      %1288 = vmatprep.subr.mxu0 0.0
      %1289 = vmatpush1.msra.mxu0 0.0
      %1290 = vmatprep.subr.mxu0 0.0
      %1291 = vmatpush1.msra.mxu0 0.0
      %1292 = vmatprep.subr.mxu0 0.0
      %1293 = vmatpush1.msra.mxu0 0.0
      %1294 = vmatprep.subr.mxu0 0.0
      %1295 = vmatpush1.msra.mxu0 0.0
      %1296 = vmatprep.subr.mxu0 0.0
      %1297 = vmatpush1.msra.mxu0 0.0
      %1298 = vmatprep.subr.mxu0 0.0
      %1299 = vmatpush1.msra.mxu0 0.0
      %1300 = vmatprep.subr.mxu0 0.0
      %1301 = vmatpush1.msra.mxu0 0.0
      %1302 = vmatprep.subr.mxu0 0.0
      %1303 = vmatpush1.msra.mxu0 0.0
      %1304 = vmatprep.subr.mxu0 0.0
      %1305 = vmatpush1.msra.mxu0 0.0
      %1306 = vmatprep.subr.mxu0 0.0
      %1307 = vmatpush1.msra.mxu0 0.0
      %1308 = vmatprep.subr.mxu0 0.0
      %1309 = vmatpush1.msra.mxu0 0.0
      %1310 = vmatprep.subr.mxu0 0.0
      %1311 = vmatpush1.msra.mxu0 0.0
      %1312 = vmatprep.subr.mxu0 0.0
      %1313 = vmatpush1.msra.mxu0 0.0
      %1314 = vmatprep.subr.mxu0 0.0
      %1315 = vmatpush1.msra.mxu0 0.0
      %1316 = vmatprep.subr.mxu0 0.0
      %1317 = vmatpush1.msra.mxu0 0.0
      %1318 = vmatprep.subr.mxu0 0.0
      %1319 = vmatpush1.msra.mxu0 0.0
      %1320 = vmatprep.subr.mxu0 0.0
      %1321 = vmatpush1.msra.mxu0 0.0
      %1322 = vmatprep.subr.mxu0 0.0
      %1323 = vmatpush1.msra.mxu0 0.0
      %1324 = vmatprep.mubr.f32.mxu0 0.0
      %1325 = vmatmul.mubr.f32.gmra.mrb[0].mxu0 %v1258
      %v1326 = vpop.f32.mrb[0].mxu0
      %v1327 = vadd.f32 %v1254, %v1326
      %v1328 = vpop.f32.mrb[0].mxu0
      %1329 = vdwg.mxu0
      %v1330 = vtanh.pop %v1327
      %v1331 = vld [vmem:[%s5] sm:$0xff]
      %v1332 = vld [vmem:[%s5 + $0x8] sm:$0xff]
      %v1333 = vld [vmem:[%s5 + $0x10] sm:$0xff]
      %v1334 = vld [vmem:[%s5 + $0x18] sm:$0xff]
      %v1335 = vld [vmem:[%s6] sm:$0x1]
      %v1337 = vlaneseq
      %v1338 = vshrl.u32 %v1337, 7
      %v1339 = vsub.s32 0, %v1338
      %v1340 = vrot.slane %v1335, %v1339
      %v1343 = vsel %vm558, %v1330, 0
      %1345 = vmatprep.subr.mxu0 0.0
      %1346 = vmatpush1.msra.mxu0 %v1331
      %1347 = vmatprep.subr.mxu0 0.0
      %1348 = vmatpush1.msra.mxu0 %v1332
      %1349 = vmatprep.subr.mxu0 0.0
      %1350 = vmatpush1.msra.mxu0 %v1333
      %1351 = vmatprep.subr.mxu0 0.0
      %1352 = vmatpush1.msra.mxu0 %v1334
      %1353 = vmatprep.subr.mxu0 0.0
      %1354 = vmatpush1.msra.mxu0 0.0
      %1355 = vmatprep.subr.mxu0 0.0
      %1356 = vmatpush1.msra.mxu0 0.0
      %1357 = vmatprep.subr.mxu0 0.0
      %1358 = vmatpush1.msra.mxu0 0.0
      %1359 = vmatprep.subr.mxu0 0.0
      %1360 = vmatpush1.msra.mxu0 0.0
      %1361 = vmatprep.subr.mxu0 0.0
      %1362 = vmatpush1.msra.mxu0 0.0
      %1363 = vmatprep.subr.mxu0 0.0
      %1364 = vmatpush1.msra.mxu0 0.0
      %1365 = vmatprep.subr.mxu0 0.0
      %1366 = vmatpush1.msra.mxu0 0.0
      %1367 = vmatprep.subr.mxu0 0.0
      %1368 = vmatpush1.msra.mxu0 0.0
      %1369 = vmatprep.subr.mxu0 0.0
      %1370 = vmatpush1.msra.mxu0 0.0
      %1371 = vmatprep.subr.mxu0 0.0
      %1372 = vmatpush1.msra.mxu0 0.0
      %1373 = vmatprep.subr.mxu0 0.0
      %1374 = vmatpush1.msra.mxu0 0.0
      %1375 = vmatprep.subr.mxu0 0.0
      %1376 = vmatpush1.msra.mxu0 0.0
      %1377 = vmatprep.subr.mxu0 0.0
      %1378 = vmatpush1.msra.mxu0 0.0
      %1379 = vmatprep.subr.mxu0 0.0
      %1380 = vmatpush1.msra.mxu0 0.0
      %1381 = vmatprep.subr.mxu0 0.0
      %1382 = vmatpush1.msra.mxu0 0.0
      %1383 = vmatprep.subr.mxu0 0.0
      %1384 = vmatpush1.msra.mxu0 0.0
      %1385 = vmatprep.subr.mxu0 0.0
      %1386 = vmatpush1.msra.mxu0 0.0
      %1387 = vmatprep.subr.mxu0 0.0
      %1388 = vmatpush1.msra.mxu0 0.0
      %1389 = vmatprep.subr.mxu0 0.0
      %1390 = vmatpush1.msra.mxu0 0.0
      %1391 = vmatprep.subr.mxu0 0.0
      %1392 = vmatpush1.msra.mxu0 0.0
      %1393 = vmatprep.subr.mxu0 0.0
      %1394 = vmatpush1.msra.mxu0 0.0
      %1395 = vmatprep.subr.mxu0 0.0
      %1396 = vmatpush1.msra.mxu0 0.0
      %1397 = vmatprep.subr.mxu0 0.0
      %1398 = vmatpush1.msra.mxu0 0.0
      %1399 = vmatprep.subr.mxu0 0.0
      %1400 = vmatpush1.msra.mxu0 0.0
      %1401 = vmatprep.subr.mxu0 0.0
      %1402 = vmatpush1.msra.mxu0 0.0
      %1403 = vmatprep.subr.mxu0 0.0
      %1404 = vmatpush1.msra.mxu0 0.0
      %1405 = vmatprep.subr.mxu0 0.0
      %1406 = vmatpush1.msra.mxu0 0.0
      %1407 = vmatprep.subr.mxu0 0.0
      %1408 = vmatpush1.msra.mxu0 0.0
      %1409 = vmatprep.mubr.f32.mxu0 0.0
      %1410 = vmatmul.mubr.f32.gmra.mrb[0].mxu0 %v1343
      %v1411 = vpop.f32.mrb[0].mxu0
      %v1412 = vadd.f32 %v1340, %v1411
      %v1413 = vpop.f32.mrb[0].mxu0
      %1414 = vdwg.mxu0
      %v1415 = vxor.u32 %v1412, 2147483648
      %v1416 = vmul.f32 %v1415, 1.442695
      %v1417 = vpow.pop %v1416
      %v1418 = vadd.f32 %v1417, 1.0
      %v1419 = vrcp.pop %v1418
      %v1420 = vmul.f32 1.0, %v1419
      %vm1421 = vcmask 31744
      %1422 = vst.msk [vmem:[%s278] sm:$0xff] %vm1421, %v1420
      %p1423 = scmp.lt.s32.totalorder %s18, 1
      %s1424 = scalar_select %p1423, %s18, 1
      %s1425 = smul.addr %s1424, 8
      %s1426 = scalar_lea.vmem %s7, %s1425
      // Predicated region
      $region49: #{tpu_custom_call.1} parent=47 // pred_check
        %p1427 = pneg %p188
      $region50: #{tpu_custom_call.1} parent=47 // pred_check_branch
        %1429 = sbr.rel (%p1427) target = $region52
      $region51: #{tpu_custom_call.1} parent=47 // pred_region
        _
      $region52: #{tpu_custom_call.1} parent=47 // pred_fallthru
        _
    $region48: #{tpu_custom_call.1} parent=5 // pred_fallthru
      _
    %p1430 = scmp.le.s32.totalorder 2, %s13
    // Predicated region
    $region53: #{tpu_custom_call.1} parent=5 // pred_check
      %p1431 = pneg %p1430
    $region54: #{tpu_custom_call.1} parent=5 // pred_check_branch
      %1433 = sbr.rel (%p1431) target = $region56
    $region55: #{tpu_custom_call.1} parent=5 // pred_region
      %s1434 = ssub.s32 %s13, 2
      // Predicated region
      $region57: #{tpu_custom_call.1} parent=55 // pred_check
        %p1435 = pneg %p194
      $region58: #{tpu_custom_call.1} parent=55 // pred_check_branch
        %1437 = sbr.rel (%p1435) target = $region60
      $region59: #{tpu_custom_call.1} parent=55 // pred_region
        %p1438 = scmp.lt.s32.totalorder %s19, 1
        %s1439 = scalar_select %p1438, %s19, 1
        %s1440 = smul.addr %s1439, 8
        %s1441 = scalar_lea.vmem %s7, %s1440
      $region60: #{tpu_custom_call.1} parent=55 // pred_fallthru
        _
    $region56: #{tpu_custom_call.1} parent=5 // pred_fallthru
      _
  $region6: #{tpu_custom_call.1} parent=0 // loop_footer
    %s17 = sadd.s32 1, %s13
  $region7: #{tpu_custom_call.1} parent=0 // loop_footer_branch
    %12 = sbr.rel target = $region3
  $region8: #{tpu_custom_call.1} parent=0 // loop_exit
    _

</llo_original>
